<compile_context>
chip_gen: v7x
topology: tpu7x:2x2x1
jax: 0.10.0
libtpu: 0.0.40
codegen_flags: <defaults>
</compile_context>

<pallas_src>
import jax
import jax.numpy as jnp
from jax.experimental import pallas as pl
from jax.experimental.pallas import tpu as pltpu


def _round_up(x, m):
    return (x + m - 1) // m * m


def _cdiv(a, b):
    return -(-a // b)


def _pick_tile(m, tile_max, align, min_steps=2):
    """Pick a lane-aligned tile: big (amortize per-step overhead), low padding,
    and >= min_steps grid steps when possible (v7x megacore sharding)."""
    m_al = _round_up(max(m, 1), align)
    steps = max(min_steps, _cdiv(m_al, tile_max))
    steps = max(1, min(steps, m_al // align))      # can't split below `align`
    tile = _round_up(_cdiv(m_al, steps), align)
    steps = _cdiv(m_al, tile)
    return tile, tile * steps, steps


# ----------------------------------------------------------------------------
# Kernel 1: fused Conv2d(5x5,s=1,p=0) + BatchNorm2d(eval) + ReLU + MaxPool(2,2)
# ----------------------------------------------------------------------------
def _conv_bn_relu_pool_kernel(p_ref, w_ref, b_ref, o_ref):
    # p_ref: (4, K_pad, mt) bf16 -- im2col patches, one slab per 2x2 pool pos
    # w_ref: (Cout, K_pad)  bf16 -- conv weights with BN scale folded in
    # b_ref: (Cout, 1)      f32  -- conv_bias*scale + (beta - mean*scale)
    # o_ref: (Cout, mt)     f32  -- pooled activations, M (=N*PH*PW) on lanes
    w = w_ref[...]
    z = jnp.dot(w, p_ref[0], preferred_element_type=jnp.float32)
    for p in range(1, 4):
        z = jnp.maximum(
            z, jnp.dot(w, p_ref[p], preferred_element_type=jnp.float32))
    # bias is shared across pool positions -> add once after the max; ReLU is
    # monotone so relu(max(.)) == max(relu(.)).
    o_ref[...] = jnp.maximum(z + b_ref[...], 0.0)


def conv_bn_relu_pool(x_cnhw, w_oihw, b, gamma, beta, mean, var,
                      eps=1e-5, m_tile_max=2048):
    """Input is channel-first (Cin, N, H, W); output is (Cout, N, PH, PW) f32."""
    Cout, Cin, kh, kw = w_oihw.shape
    C, N, H, W = x_cnhw.shape
    assert C == Cin
    OH, OW = H - kh + 1, W - kw + 1
    PH, PW = OH // 2, OW // 2
    M = N * PH * PW
    K = Cin * kh * kw

    # Fold eval-mode BatchNorm into the conv weights / bias (one-time fold).
    scale = gamma / jnp.sqrt(var + eps)
    wmat = w_oihw.reshape(Cout, K) * scale[:, None]              # (Cout, K)
    bvec = (b * scale + (beta - mean * scale)).reshape(Cout, 1)  # (Cout, 1)

    m_tile, M_pad, steps = _pick_tile(M, m_tile_max, 128)
    K_pad = _round_up(K, 16)                                     # bf16 packing

    # bf16 BEFORE the patch build: halves the HBM bytes of the glue path.
    xb = x_cnhw.astype(jnp.bfloat16)

    # Transposed im2col, one patch matrix per 2x2 pooling-window position:
    # patches[2a+b2, c*kh*kw+i*kw+j, n*PH*PW+ph*PW+pw] = x[c, n, 2ph+a+i, 2pw+b2+j]
    pos = []
    for a in range(2):
        for b2 in range(2):
            slabs = []
            for i in range(kh):
                for j in range(kw):
                    slabs.append(
                        xb[:, :, a + i: a + i + 2 * PH: 2,
                           b2 + j: b2 + j + 2 * PW: 2])          # (C,N,PH,PW)
            p = jnp.stack(slabs, axis=1)              # (C, kh*kw, N, PH, PW)
            pos.append(p.reshape(K, M))
    patches = jnp.stack(pos, axis=0)                  # (4, K, M) bf16
    patches = jnp.pad(patches, ((0, 0), (0, K_pad - K), (0, M_pad - M)))

    wmat = jnp.pad(wmat, ((0, 0), (0, K_pad - K))).astype(jnp.bfloat16)
    bvec = bvec.astype(jnp.float32)

    out_t = pl.pallas_call(
        _conv_bn_relu_pool_kernel,
        out_shape=jax.ShapeDtypeStruct((Cout, M_pad), jnp.float32),
        grid_spec=pltpu.PrefetchScalarGridSpec(
            num_scalar_prefetch=0,
            grid=(steps,),
            in_specs=[
                pl.BlockSpec((4, K_pad, m_tile), lambda i: (0, 0, i)),
                pl.BlockSpec((Cout, K_pad), lambda i: (0, 0)),
                pl.BlockSpec((Cout, 1), lambda i: (0, 0)),
            ],
            out_specs=pl.BlockSpec((Cout, m_tile), lambda i: (0, i)),
        ),
        compiler_params=pltpu.CompilerParams(
            dimension_semantics=("parallel",)),
    )(patches, wmat, bvec)

    return out_t[:, :M].reshape(Cout, N, PH, PW)


# ----------------------------------------------------------------------------
# Kernel 2: fused FC stack  fc(400->120) -> ReLU -> fc1(120->84) -> ReLU -> fc2
# (all feature widths zero-padded to 128 lanes; logits sliced in the wrapper)
# ----------------------------------------------------------------------------
def _fc_stack_kernel(x_ref, w1_ref, b1_ref, w2_ref, b2_ref, w3_ref, b3_ref,
                     o_ref):
    h = jnp.dot(x_ref[...], w1_ref[...], preferred_element_type=jnp.float32)
    h = jnp.maximum(h + b1_ref[...], 0.0).astype(w2_ref.dtype)
    h = jnp.dot(h, w2_ref[...], preferred_element_type=jnp.float32)
    h = jnp.maximum(h + b2_ref[...], 0.0).astype(w3_ref.dtype)
    o_ref[...] = (jnp.dot(h, w3_ref[...], preferred_element_type=jnp.float32)
                  + b3_ref[...])


def fc_stack(x, w1, b1, w2, b2, w3, b3, m_tile_max=1024):
    N, K = x.shape
    D1, D2, NC = w1.shape[0], w2.shape[0], w3.shape[0]
    D1p, D2p, NCp = _round_up(D1, 128), _round_up(D2, 128), _round_up(NC, 128)

    m_tile, N_pad, steps = _pick_tile(N, m_tile_max, 16)
    x_p = jnp.pad(x.astype(jnp.bfloat16), ((0, N_pad - N), (0, 0)))

    def wpad(w, rows, cols):  # torch (out,in) -> padded (in_pad, out_pad) bf16
        wt = w.T
        return jnp.pad(wt, ((0, rows - wt.shape[0]),
                            (0, cols - wt.shape[1]))).astype(jnp.bfloat16)

    def bpad(bv, cols):
        return jnp.pad(bv, (0, cols - bv.shape[0])).reshape(1, cols).astype(
            jnp.float32)

    out = pl.pallas_call(
        _fc_stack_kernel,
        out_shape=jax.ShapeDtypeStruct((N_pad, NCp), jnp.float32),
        grid_spec=pltpu.PrefetchScalarGridSpec(
            num_scalar_prefetch=0,
            grid=(steps,),
            in_specs=[
                pl.BlockSpec((m_tile, K), lambda i: (i, 0)),
                pl.BlockSpec((K, D1p), lambda i: (0, 0)),
                pl.BlockSpec((1, D1p), lambda i: (0, 0)),
                pl.BlockSpec((D1p, D2p), lambda i: (0, 0)),
                pl.BlockSpec((1, D2p), lambda i: (0, 0)),
                pl.BlockSpec((D2p, NCp), lambda i: (0, 0)),
                pl.BlockSpec((1, NCp), lambda i: (0, 0)),
            ],
            out_specs=pl.BlockSpec((m_tile, NCp), lambda i: (i, 0)),
        ),
        compiler_params=pltpu.CompilerParams(
            dimension_semantics=("parallel",)),
    )(x_p,
      wpad(w1, K, D1p), bpad(b1, D1p),
      wpad(w2, D1p, D2p), bpad(b2, D2p),
      wpad(w3, D2p, NCp), bpad(b3, NCp))
    return out[:N, :NC]


# ----------------------------------------------------------------------------
# Parameters (PyTorch-default-style init, fresh keys for every tensor)
# ----------------------------------------------------------------------------
def init_params(key, num_classes):
    ks = jax.random.split(key, 10)

    def u(k, shape, fan_in):
        bound = 1.0 / jnp.sqrt(float(fan_in))
        return jax.random.uniform(k, shape, jnp.float32, -bound, bound)

    return {
        "conv1_w": u(ks[0], (6, 1, 5, 5), 1 * 25),
        "conv1_b": u(ks[1], (6,), 1 * 25),
        "bn1_gamma": jnp.ones((6,), jnp.float32),
        "bn1_beta": jnp.zeros((6,), jnp.float32),
        "bn1_mean": jnp.zeros((6,), jnp.float32),
        "bn1_var": jnp.ones((6,), jnp.float32),
        "conv2_w": u(ks[2], (16, 6, 5, 5), 6 * 25),
        "conv2_b": u(ks[3], (16,), 6 * 25),
        "bn2_gamma": jnp.ones((16,), jnp.float32),
        "bn2_beta": jnp.zeros((16,), jnp.float32),
        "bn2_mean": jnp.zeros((16,), jnp.float32),
        "bn2_var": jnp.ones((16,), jnp.float32),
        "fc_w": u(ks[4], (120, 400), 400),
        "fc_b": u(ks[5], (120,), 400),
        "fc1_w": u(ks[6], (84, 120), 120),
        "fc1_b": u(ks[7], (84,), 120),
        "fc2_w": u(ks[8], (num_classes, 84), 84),
        "fc2_b": u(ks[9], (num_classes,), 84),
    }


# ----------------------------------------------------------------------------
# Full LeNet5 forward (eval mode)
# ----------------------------------------------------------------------------
def lenet5_forward(params, x_nchw):
    x = jnp.transpose(x_nchw, (1, 0, 2, 3))                       # -> (C,N,H,W)

    o1 = conv_bn_relu_pool(x, params["conv1_w"], params["conv1_b"],
                           params["bn1_gamma"], params["bn1_beta"],
                           params["bn1_mean"], params["bn1_var"])  # (6,N,14,14)

    # conv2 consumes channel-first directly -> no inter-layer transpose.
    o2 = conv_bn_relu_pool(o1, params["conv2_w"], params["conv2_b"],
                           params["bn2_gamma"], params["bn2_beta"],
                           params["bn2_mean"], params["bn2_var"])  # (16,N,5,5)

    # PyTorch flattens NCHW: (N, 16, 5, 5) -> (N, 400) in (c, h, w) order.
    N = x_nchw.shape[0]
    flat = jnp.transpose(o2, (1, 0, 2, 3)).reshape(N, -1)

    return fc_stack(flat, params["fc_w"], params["fc_b"],
                    params["fc1_w"], params["fc1_b"],
                    params["fc2_w"], params["fc2_b"])


if __name__ == "__main__":
    num_classes = 10
    key = jax.random.PRNGKey(0)
    kx, kp = jax.random.split(key)

    # LeNet5 requires 32x32 single-channel inputs (so that flatten == 400).
    x = jax.random.normal(kx, (2, 1, 32, 32), dtype=jnp.float32)
    params = init_params(kp, num_classes)

    fwd = jax.jit(lenet5_forward)
    logits = fwd(params, x)
    jax.block_until_ready(logits)
    assert logits.shape == (2, num_classes)
    assert bool(jnp.all(jnp.isfinite(logits)))
    print("KERNEL_OK")
</pallas_src>

<mosaic_0001>
module attributes {stable_mosaic.version = 11 : i64} {
  func.func @_conv_bn_relu_pool_kernel(%arg0: i32, %arg1: memref<4x32x256xbf16, #tpu.memory_space<vmem>>, %arg2: memref<6x32xbf16, #tpu.memory_space<vmem>>, %arg3: memref<6x1xf32, #tpu.memory_space<vmem>>, %arg4: memref<6x256xf32, #tpu.memory_space<vmem>>) attributes {dimension_semantics = [#tpu.dimension_semantics<parallel>], iteration_bounds = array<i64: 2>, scalar_prefetch = 0 : i64, scratch_operands = 0 : i64, tpu.core_type = #tpu.core_type<tc>, window_params = [{transform_indices = @transform_0, window_bounds = array<i64: 4, 32, 256>}, {pipeline_mode = #tpu.pipeline_mode<synchronous>, transform_indices = @transform_1, window_bounds = array<i64: 6, 32>}, {pipeline_mode = #tpu.pipeline_mode<synchronous>, transform_indices = @transform_2, window_bounds = array<i64: 6, 1>}, {transform_indices = @transform_3, window_bounds = array<i64: 6, 256>}]} {
    %c0 = arith.constant 0 : index
    %c0_0 = arith.constant 0 : index
    %0 = vector.load %arg2[%c0, %c0_0] : memref<6x32xbf16, #tpu.memory_space<vmem>>, vector<6x32xbf16>
    %c0_1 = arith.constant 0 : index
    %c0_2 = arith.constant 0 : index
    %c0_3 = arith.constant 0 : index
    %1 = vector.load %arg1[%c0_1, %c0_2, %c0_3] : memref<4x32x256xbf16, #tpu.memory_space<vmem>>, vector<1x32x256xbf16>
    %2 = vector.shape_cast %1 : vector<1x32x256xbf16> to vector<32x256xbf16>
    %cst = arith.constant dense<0.000000e+00> : vector<6x256xf32>
    %3 = tpu.matmul %0, %2, %cst {dimension_numbers = #tpu.dot_dimension_numbers<[1], [0], [0], [1], [0, 0, 1, 1], [], []>} : vector<6x32xbf16>, vector<32x256xbf16>, vector<6x256xf32> -> vector<6x256xf32>
    %c1 = arith.constant 1 : index
    %c0_4 = arith.constant 0 : index
    %c0_5 = arith.constant 0 : index
    %4 = vector.load %arg1[%c1, %c0_4, %c0_5] : memref<4x32x256xbf16, #tpu.memory_space<vmem>>, vector<1x32x256xbf16>
    %5 = vector.shape_cast %4 : vector<1x32x256xbf16> to vector<32x256xbf16>
    %cst_6 = arith.constant dense<0.000000e+00> : vector<6x256xf32>
    %6 = tpu.matmul %0, %5, %cst_6 {dimension_numbers = #tpu.dot_dimension_numbers<[1], [0], [0], [1], [0, 0, 1, 1], [], []>} : vector<6x32xbf16>, vector<32x256xbf16>, vector<6x256xf32> -> vector<6x256xf32>
    %7 = arith.maximumf %3, %6 : vector<6x256xf32>
    %c2 = arith.constant 2 : index
    %c0_7 = arith.constant 0 : index
    %c0_8 = arith.constant 0 : index
    %8 = vector.load %arg1[%c2, %c0_7, %c0_8] : memref<4x32x256xbf16, #tpu.memory_space<vmem>>, vector<1x32x256xbf16>
    %9 = vector.shape_cast %8 : vector<1x32x256xbf16> to vector<32x256xbf16>
    %cst_9 = arith.constant dense<0.000000e+00> : vector<6x256xf32>
    %10 = tpu.matmul %0, %9, %cst_9 {dimension_numbers = #tpu.dot_dimension_numbers<[1], [0], [0], [1], [0, 0, 1, 1], [], []>} : vector<6x32xbf16>, vector<32x256xbf16>, vector<6x256xf32> -> vector<6x256xf32>
    %11 = arith.maximumf %7, %10 : vector<6x256xf32>
    %c3 = arith.constant 3 : index
    %c0_10 = arith.constant 0 : index
    %c0_11 = arith.constant 0 : index
    %12 = vector.load %arg1[%c3, %c0_10, %c0_11] : memref<4x32x256xbf16, #tpu.memory_space<vmem>>, vector<1x32x256xbf16>
    %13 = vector.shape_cast %12 : vector<1x32x256xbf16> to vector<32x256xbf16>
    %cst_12 = arith.constant dense<0.000000e+00> : vector<6x256xf32>
    %14 = tpu.matmul %0, %13, %cst_12 {dimension_numbers = #tpu.dot_dimension_numbers<[1], [0], [0], [1], [0, 0, 1, 1], [], []>} : vector<6x32xbf16>, vector<32x256xbf16>, vector<6x256xf32> -> vector<6x256xf32>
    %15 = arith.maximumf %11, %14 : vector<6x256xf32>
    %c0_13 = arith.constant 0 : index
    %c0_14 = arith.constant 0 : index
    %16 = vector.load %arg3[%c0_13, %c0_14] : memref<6x1xf32, #tpu.memory_space<vmem>>, vector<6x1xf32>
    %17 = vector.broadcast %16 : vector<6x1xf32> to vector<6x256xf32>
    %18 = arith.addf %15, %17 : vector<6x256xf32>
    %cst_15 = arith.constant 0.000000e+00 : f32
    %19 = vector.broadcast %cst_15 : f32 to vector<6x256xf32>
    %20 = arith.maximumf %18, %19 : vector<6x256xf32>
    %c0_16 = arith.constant 0 : index
    %c0_17 = arith.constant 0 : index
    %21 = vector.load %arg4[%c0_16, %c0_17] : memref<6x256xf32, #tpu.memory_space<vmem>>, vector<6x256xf32>
    tpu.vector_store %arg4[%c0_16, %c0_17], %20 {strides = array<i32>} : memref<6x256xf32, #tpu.memory_space<vmem>>, vector<6x256xf32>,
    return
  }
  func.func @transform_0(%arg0: i32) -> (i32, i32, i32) {
    %c0_i32 = arith.constant 0 : i32
    %c0_i32_0 = arith.constant 0 : i32
    %c0_i32_1 = arith.constant 0 : i32
    return %c0_i32, %c0_i32_0, %arg0 : i32, i32, i32
  }
  func.func @transform_1(%arg0: i32) -> (i32, i32) {
    %c0_i32 = arith.constant 0 : i32
    %c0_i32_0 = arith.constant 0 : i32
    %c0_i32_1 = arith.constant 0 : i32
    return %c0_i32, %c0_i32_0 : i32, i32
  }
  func.func @transform_2(%arg0: i32) -> (i32, i32) {
    %c0_i32 = arith.constant 0 : i32
    %c0_i32_0 = arith.constant 0 : i32
    %c0_i32_1 = arith.constant 0 : i32
    return %c0_i32, %c0_i32_0 : i32, i32
  }
  func.func @transform_3(%arg0: i32) -> (i32, i32) {
    %c0_i32 = arith.constant 0 : i32
    %c0_i32_0 = arith.constant 0 : i32
    return %c0_i32, %arg0 : i32, i32
  }
}

module attributes {stable_mosaic.version = 11 : i64} {
  func.func @_conv_bn_relu_pool_kernel(%arg0: i32, %arg1: memref<4x160x128xbf16, #tpu.memory_space<vmem>>, %arg2: memref<16x160xbf16, #tpu.memory_space<vmem>>, %arg3: memref<16x1xf32, #tpu.memory_space<vmem>>, %arg4: memref<16x128xf32, #tpu.memory_space<vmem>>) attributes {dimension_semantics = [#tpu.dimension_semantics<parallel>], iteration_bounds = array<i64: 1>, scalar_prefetch = 0 : i64, scratch_operands = 0 : i64, tpu.core_type = #tpu.core_type<tc>, window_params = [{transform_indices = @transform_0, window_bounds = array<i64: 4, 160, 128>}, {pipeline_mode = #tpu.pipeline_mode<synchronous>, transform_indices = @transform_1, window_bounds = array<i64: 16, 160>}, {pipeline_mode = #tpu.pipeline_mode<synchronous>, transform_indices = @transform_2, window_bounds = array<i64: 16, 1>}, {transform_indices = @transform_3, window_bounds = array<i64: 16, 128>}]} {
    %c0 = arith.constant 0 : index
    %c0_0 = arith.constant 0 : index
    %0 = vector.load %arg2[%c0, %c0_0] : memref<16x160xbf16, #tpu.memory_space<vmem>>, vector<16x160xbf16>
    %c0_1 = arith.constant 0 : index
    %c0_2 = arith.constant 0 : index
    %c0_3 = arith.constant 0 : index
    %1 = vector.load %arg1[%c0_1, %c0_2, %c0_3] : memref<4x160x128xbf16, #tpu.memory_space<vmem>>, vector<1x160x128xbf16>
    %2 = vector.shape_cast %1 : vector<1x160x128xbf16> to vector<160x128xbf16>
    %cst = arith.constant dense<0.000000e+00> : vector<16x128xf32>
    %3 = tpu.matmul %0, %2, %cst {dimension_numbers = #tpu.dot_dimension_numbers<[1], [0], [0], [1], [0, 0, 1, 1], [], []>} : vector<16x160xbf16>, vector<160x128xbf16>, vector<16x128xf32> -> vector<16x128xf32>
    %c1 = arith.constant 1 : index
    %c0_4 = arith.constant 0 : index
    %c0_5 = arith.constant 0 : index
    %4 = vector.load %arg1[%c1, %c0_4, %c0_5] : memref<4x160x128xbf16, #tpu.memory_space<vmem>>, vector<1x160x128xbf16>
    %5 = vector.shape_cast %4 : vector<1x160x128xbf16> to vector<160x128xbf16>
    %cst_6 = arith.constant dense<0.000000e+00> : vector<16x128xf32>
    %6 = tpu.matmul %0, %5, %cst_6 {dimension_numbers = #tpu.dot_dimension_numbers<[1], [0], [0], [1], [0, 0, 1, 1], [], []>} : vector<16x160xbf16>, vector<160x128xbf16>, vector<16x128xf32> -> vector<16x128xf32>
    %7 = arith.maximumf %3, %6 : vector<16x128xf32>
    %c2 = arith.constant 2 : index
    %c0_7 = arith.constant 0 : index
    %c0_8 = arith.constant 0 : index
    %8 = vector.load %arg1[%c2, %c0_7, %c0_8] : memref<4x160x128xbf16, #tpu.memory_space<vmem>>, vector<1x160x128xbf16>
    %9 = vector.shape_cast %8 : vector<1x160x128xbf16> to vector<160x128xbf16>
    %cst_9 = arith.constant dense<0.000000e+00> : vector<16x128xf32>
    %10 = tpu.matmul %0, %9, %cst_9 {dimension_numbers = #tpu.dot_dimension_numbers<[1], [0], [0], [1], [0, 0, 1, 1], [], []>} : vector<16x160xbf16>, vector<160x128xbf16>, vector<16x128xf32> -> vector<16x128xf32>
    %11 = arith.maximumf %7, %10 : vector<16x128xf32>
    %c3 = arith.constant 3 : index
    %c0_10 = arith.constant 0 : index
    %c0_11 = arith.constant 0 : index
    %12 = vector.load %arg1[%c3, %c0_10, %c0_11] : memref<4x160x128xbf16, #tpu.memory_space<vmem>>, vector<1x160x128xbf16>
    %13 = vector.shape_cast %12 : vector<1x160x128xbf16> to vector<160x128xbf16>
    %cst_12 = arith.constant dense<0.000000e+00> : vector<16x128xf32>
    %14 = tpu.matmul %0, %13, %cst_12 {dimension_numbers = #tpu.dot_dimension_numbers<[1], [0], [0], [1], [0, 0, 1, 1], [], []>} : vector<16x160xbf16>, vector<160x128xbf16>, vector<16x128xf32> -> vector<16x128xf32>
    %15 = arith.maximumf %11, %14 : vector<16x128xf32>
    %c0_13 = arith.constant 0 : index
    %c0_14 = arith.constant 0 : index
    %16 = vector.load %arg3[%c0_13, %c0_14] : memref<16x1xf32, #tpu.memory_space<vmem>>, vector<16x1xf32>
    %17 = vector.broadcast %16 : vector<16x1xf32> to vector<16x128xf32>
    %18 = arith.addf %15, %17 : vector<16x128xf32>
    %cst_15 = arith.constant 0.000000e+00 : f32
    %19 = vector.broadcast %cst_15 : f32 to vector<16x128xf32>
    %20 = arith.maximumf %18, %19 : vector<16x128xf32>
    %c0_16 = arith.constant 0 : index
    %c0_17 = arith.constant 0 : index
    %21 = vector.load %arg4[%c0_16, %c0_17] : memref<16x128xf32, #tpu.memory_space<vmem>>, vector<16x128xf32>
    tpu.vector_store %arg4[%c0_16, %c0_17], %20 {strides = array<i32>} : memref<16x128xf32, #tpu.memory_space<vmem>>, vector<16x128xf32>,
    return
  }
  func.func @transform_0(%arg0: i32) -> (i32, i32, i32) {
    %c0_i32 = arith.constant 0 : i32
    %c0_i32_0 = arith.constant 0 : i32
    %c0_i32_1 = arith.constant 0 : i32
    return %c0_i32, %c0_i32_0, %arg0 : i32, i32, i32
  }
  func.func @transform_1(%arg0: i32) -> (i32, i32) {
    %c0_i32 = arith.constant 0 : i32
    %c0_i32_0 = arith.constant 0 : i32
    %c0_i32_1 = arith.constant 0 : i32
    return %c0_i32, %c0_i32_0 : i32, i32
  }
  func.func @transform_2(%arg0: i32) -> (i32, i32) {
    %c0_i32 = arith.constant 0 : i32
    %c0_i32_0 = arith.constant 0 : i32
    %c0_i32_1 = arith.constant 0 : i32
    return %c0_i32, %c0_i32_0 : i32, i32
  }
  func.func @transform_3(%arg0: i32) -> (i32, i32) {
    %c0_i32 = arith.constant 0 : i32
    %c0_i32_0 = arith.constant 0 : i32
    return %c0_i32, %arg0 : i32, i32
  }
}

module attributes {stable_mosaic.version = 11 : i64} {
  func.func @_fc_stack_kernel(%arg0: i32, %arg1: memref<16x400xbf16, #tpu.memory_space<vmem>>, %arg2: memref<400x128xbf16, #tpu.memory_space<vmem>>, %arg3: memref<1x128xf32, #tpu.memory_space<vmem>>, %arg4: memref<128x128xbf16, #tpu.memory_space<vmem>>, %arg5: memref<1x128xf32, #tpu.memory_space<vmem>>, %arg6: memref<128x128xbf16, #tpu.memory_space<vmem>>, %arg7: memref<1x128xf32, #tpu.memory_space<vmem>>, %arg8: memref<16x128xf32, #tpu.memory_space<vmem>>) attributes {dimension_semantics = [#tpu.dimension_semantics<parallel>], iteration_bounds = array<i64: 1>, scalar_prefetch = 0 : i64, scratch_operands = 0 : i64, tpu.core_type = #tpu.core_type<tc>, window_params = [{transform_indices = @transform_0, window_bounds = array<i64: 16, 400>}, {pipeline_mode = #tpu.pipeline_mode<synchronous>, transform_indices = @transform_1, window_bounds = array<i64: 400, 128>}, {pipeline_mode = #tpu.pipeline_mode<synchronous>, transform_indices = @transform_2, window_bounds = array<i64: 1, 128>}, {pipeline_mode = #tpu.pipeline_mode<synchronous>, transform_indices = @transform_3, window_bounds = array<i64: 128, 128>}, {pipeline_mode = #tpu.pipeline_mode<synchronous>, transform_indices = @transform_4, window_bounds = array<i64: 1, 128>}, {pipeline_mode = #tpu.pipeline_mode<synchronous>, transform_indices = @transform_5, window_bounds = array<i64: 128, 128>}, {pipeline_mode = #tpu.pipeline_mode<synchronous>, transform_indices = @transform_6, window_bounds = array<i64: 1, 128>}, {transform_indices = @transform_7, window_bounds = array<i64: 16, 128>}]} {
    %c0 = arith.constant 0 : index
    %c0_0 = arith.constant 0 : index
    %0 = vector.load %arg1[%c0, %c0_0] : memref<16x400xbf16, #tpu.memory_space<vmem>>, vector<16x400xbf16>
    %c0_1 = arith.constant 0 : index
    %c0_2 = arith.constant 0 : index
    %1 = vector.load %arg2[%c0_1, %c0_2] : memref<400x128xbf16, #tpu.memory_space<vmem>>, vector<400x128xbf16>
    %cst = arith.constant dense<0.000000e+00> : vector<16x128xf32>
    %2 = tpu.matmul %0, %1, %cst {dimension_numbers = #tpu.dot_dimension_numbers<[1], [0], [0], [1], [0, 0, 1, 1], [], []>} : vector<16x400xbf16>, vector<400x128xbf16>, vector<16x128xf32> -> vector<16x128xf32>
    %c0_3 = arith.constant 0 : index
    %c0_4 = arith.constant 0 : index
    %3 = vector.load %arg3[%c0_3, %c0_4] : memref<1x128xf32, #tpu.memory_space<vmem>>, vector<1x128xf32>
    %4 = vector.broadcast %3 : vector<1x128xf32> to vector<16x128xf32>
    %5 = arith.addf %2, %4 : vector<16x128xf32>
    %cst_5 = arith.constant 0.000000e+00 : f32
    %6 = vector.broadcast %cst_5 : f32 to vector<16x128xf32>
    %7 = arith.maximumf %5, %6 : vector<16x128xf32>
    %8 = arith.truncf %7 : vector<16x128xf32> to vector<16x128xbf16>
    %c0_6 = arith.constant 0 : index
    %c0_7 = arith.constant 0 : index
    %9 = vector.load %arg4[%c0_6, %c0_7] : memref<128x128xbf16, #tpu.memory_space<vmem>>, vector<128x128xbf16>
    %cst_8 = arith.constant dense<0.000000e+00> : vector<16x128xf32>
    %10 = tpu.matmul %8, %9, %cst_8 {dimension_numbers = #tpu.dot_dimension_numbers<[1], [0], [0], [1], [0, 0, 1, 1], [], []>} : vector<16x128xbf16>, vector<128x128xbf16>, vector<16x128xf32> -> vector<16x128xf32>
    %c0_9 = arith.constant 0 : index
    %c0_10 = arith.constant 0 : index
    %11 = vector.load %arg5[%c0_9, %c0_10] : memref<1x128xf32, #tpu.memory_space<vmem>>, vector<1x128xf32>
    %12 = vector.broadcast %11 : vector<1x128xf32> to vector<16x128xf32>
    %13 = arith.addf %10, %12 : vector<16x128xf32>
    %cst_11 = arith.constant 0.000000e+00 : f32
    %14 = vector.broadcast %cst_11 : f32 to vector<16x128xf32>
    %15 = arith.maximumf %13, %14 : vector<16x128xf32>
    %16 = arith.truncf %15 : vector<16x128xf32> to vector<16x128xbf16>
    %c0_12 = arith.constant 0 : index
    %c0_13 = arith.constant 0 : index
    %17 = vector.load %arg6[%c0_12, %c0_13] : memref<128x128xbf16, #tpu.memory_space<vmem>>, vector<128x128xbf16>
    %cst_14 = arith.constant dense<0.000000e+00> : vector<16x128xf32>
    %18 = tpu.matmul %16, %17, %cst_14 {dimension_numbers = #tpu.dot_dimension_numbers<[1], [0], [0], [1], [0, 0, 1, 1], [], []>} : vector<16x128xbf16>, vector<128x128xbf16>, vector<16x128xf32> -> vector<16x128xf32>
    %c0_15 = arith.constant 0 : index
    %c0_16 = arith.constant 0 : index
    %19 = vector.load %arg7[%c0_15, %c0_16] : memref<1x128xf32, #tpu.memory_space<vmem>>, vector<1x128xf32>
    %20 = vector.broadcast %19 : vector<1x128xf32> to vector<16x128xf32>
    %21 = arith.addf %18, %20 : vector<16x128xf32>
    %c0_17 = arith.constant 0 : index
    %c0_18 = arith.constant 0 : index
    %22 = vector.load %arg8[%c0_17, %c0_18] : memref<16x128xf32, #tpu.memory_space<vmem>>, vector<16x128xf32>
    tpu.vector_store %arg8[%c0_17, %c0_18], %21 {strides = array<i32>} : memref<16x128xf32, #tpu.memory_space<vmem>>, vector<16x128xf32>,
    return
  }
  func.func @transform_0(%arg0: i32) -> (i32, i32) {
    %c0_i32 = arith.constant 0 : i32
    %c0_i32_0 = arith.constant 0 : i32
    return %arg0, %c0_i32 : i32, i32
  }
  func.func @transform_1(%arg0: i32) -> (i32, i32) {
    %c0_i32 = arith.constant 0 : i32
    %c0_i32_0 = arith.constant 0 : i32
    %c0_i32_1 = arith.constant 0 : i32
    return %c0_i32, %c0_i32_0 : i32, i32
  }
  func.func @transform_2(%arg0: i32) -> (i32, i32) {
    %c0_i32 = arith.constant 0 : i32
    %c0_i32_0 = arith.constant 0 : i32
    %c0_i32_1 = arith.constant 0 : i32
    return %c0_i32, %c0_i32_0 : i32, i32
  }
  func.func @transform_3(%arg0: i32) -> (i32, i32) {
    %c0_i32 = arith.constant 0 : i32
    %c0_i32_0 = arith.constant 0 : i32
    %c0_i32_1 = arith.constant 0 : i32
    return %c0_i32, %c0_i32_0 : i32, i32
  }
  func.func @transform_4(%arg0: i32) -> (i32, i32) {
    %c0_i32 = arith.constant 0 : i32
    %c0_i32_0 = arith.constant 0 : i32
    %c0_i32_1 = arith.constant 0 : i32
    return %c0_i32, %c0_i32_0 : i32, i32
  }
  func.func @transform_5(%arg0: i32) -> (i32, i32) {
    %c0_i32 = arith.constant 0 : i32
    %c0_i32_0 = arith.constant 0 : i32
    %c0_i32_1 = arith.constant 0 : i32
    return %c0_i32, %c0_i32_0 : i32, i32
  }
  func.func @transform_6(%arg0: i32) -> (i32, i32) {
    %c0_i32 = arith.constant 0 : i32
    %c0_i32_0 = arith.constant 0 : i32
    %c0_i32_1 = arith.constant 0 : i32
    return %c0_i32, %c0_i32_0 : i32, i32
  }
  func.func @transform_7(%arg0: i32) -> (i32, i32) {
    %c0_i32 = arith.constant 0 : i32
    %c0_i32_0 = arith.constant 0 : i32
    return %arg0, %c0_i32 : i32, i32
  }
}

</mosaic_0001>

<llo_original>
// kernel: lenet5_forward.3
$region0: #{lenet5_forward.3}
  #allocation0 [shape = 'u32[]', space=smem, size = 0x4, offset = 0x4, fixed_abs, tag = 'smem constant byte address 0x4 - core index']
  #allocation1 [shape = 'u32[144,128]{1,0:T(1,128)}', space=vmem, size = 0x12000, scoped, tag = 'internal scratch']
  %s0 = inlined_call_operand.vmem [shape: bf16[4,32,512], index: 0, kind: input, shape index: {}]
  %s1 = inlined_call_operand.vmem [shape: bf16[6,32], index: 1, kind: input, shape index: {}]
  %s2 = inlined_call_operand.vmem [shape: f32[6,1], index: 2, kind: input, shape index: {}]
  %s3 = inlined_call_operand.vmem [shape: f32[6,512], index: 3, kind: output, shape index: {}]
  %s4 = sld [smem:[#allocation0]]
  $region83: #{lenet5_forward.3} parent=0
    _
  %s6 = ssub.s32 1, %s4
  %s7 = scalar_select 0, %s6, %s4
  $region1: #{lenet5_forward.3} parent=0
    #allocation2 [shape = 'u8[131072]{0}', space=vmem, size = 0x20000, scoped, tag = 'input window, operand 0']
    loop: start=0, step=1, limit=4
    $region2: #{lenet5_forward.3} parent=1 // loop_pre_header
      _
    $region3: #{lenet5_forward.3} parent=1 // loop_header
      %s9 = sphi 0, %s13
      %p10 = scmp.ge.s32.totalorder %s9, 4
      %s19 = sphi 0, %s21
      %s22 = sphi 0, %s19
      %s23 = sphi 0, %s22
      %s39 = sphi 0, %s23
      %s43 = sphi 0, %s43
      %s45 = sphi 0, %s43
      %s46 = sphi 0, %s45
      %s60 = sphi 0, %s46
      %s64 = sphi 0, %s64
      %s66 = sphi 0, %s64
      %s67 = sphi 0, %s66
      %s81 = sphi 0, %s67
      %s87 = sphi 0, %s89
      %s90 = sphi 0, %s87
      %s91 = sphi 0, %s90
      %s107 = sphi 0, %s91
    $region4: #{lenet5_forward.3} parent=1 // loop_header_branch
      %12 = sbr.rel (%p10) target = $region8
    $region5: #{lenet5_forward.3} parent=1 // loop_body
      %s14 = ssub.s32 %s9, 1
      %s15 = ssub.s32 %s9, 2
      %s16 = sadd.s32 %s9, 1
      %s17 = ssub.s32 %s9, %s16
      %p18 = scmp.eq.s32.totalorder %s17, 0
      %s20 = sadd.s32 %s19, 1
      %s21 = scalar_select %p18, %s19, %s20
      %p24 = pneg %p18
      %p25 = scmp.eq.s32.totalorder %s9, 1
      %p26 = por %p24, %p25
      %p27 = scmp.ne.s32.totalorder %s19, %s22
      %p28 = scmp.eq.s32.totalorder %s9, 0
      %p29 = por %p27, %p28
      %p30 = scmp.ne.s32.totalorder %s19, %s22
      %p31 = scmp.eq.s32.totalorder %s14, 1
      %p32 = por %p30, %p31
      %p33 = scmp.ne.s32.totalorder %s22, %s23
      %p34 = scmp.eq.s32.totalorder %s14, 0
      %p35 = por %p33, %p34
      %p36 = scmp.ne.s32.totalorder %s22, %s23
      %p37 = scmp.eq.s32.totalorder %s15, 1
      %p38 = por %p36, %p37
      %p40 = scmp.ne.s32.totalorder %s23, %s39
      %p41 = scmp.eq.s32.totalorder %s15, 0
      %p42 = por %p40, %p41
      %s44 = sadd.s32 %s43, 1
      %p47 = scmp.eq.s32.totalorder %s9, 1
      %p48 = scmp.ne.s32.totalorder %s43, %s45
      %p49 = scmp.eq.s32.totalorder %s9, 0
      %p50 = por %p48, %p49
      %p51 = scmp.ne.s32.totalorder %s43, %s45
      %p52 = scmp.eq.s32.totalorder %s14, 1
      %p53 = por %p51, %p52
      %p54 = scmp.ne.s32.totalorder %s45, %s46
      %p55 = scmp.eq.s32.totalorder %s14, 0
      %p56 = por %p54, %p55
      %p57 = scmp.ne.s32.totalorder %s45, %s46
      %p58 = scmp.eq.s32.totalorder %s15, 1
      %p59 = por %p57, %p58
      %p61 = scmp.ne.s32.totalorder %s46, %s60
      %p62 = scmp.eq.s32.totalorder %s15, 0
      %p63 = por %p61, %p62
      %s65 = sadd.s32 %s64, 1
      %p68 = scmp.eq.s32.totalorder %s9, 1
      %p69 = scmp.ne.s32.totalorder %s64, %s66
      %p70 = scmp.eq.s32.totalorder %s9, 0
      %p71 = por %p69, %p70
      %p72 = scmp.ne.s32.totalorder %s64, %s66
      %p73 = scmp.eq.s32.totalorder %s14, 1
      %p74 = por %p72, %p73
      %p75 = scmp.ne.s32.totalorder %s66, %s67
      %p76 = scmp.eq.s32.totalorder %s14, 0
      %p77 = por %p75, %p76
      %p78 = scmp.ne.s32.totalorder %s66, %s67
      %p79 = scmp.eq.s32.totalorder %s15, 1
      %p80 = por %p78, %p79
      %p82 = scmp.ne.s32.totalorder %s67, %s81
      %p83 = scmp.eq.s32.totalorder %s15, 0
      %p84 = por %p82, %p83
      %s85 = ssub.s32 %s9, %s16
      %p86 = scmp.eq.s32.totalorder %s85, 0
      %s88 = sadd.s32 %s87, 1
      %s89 = scalar_select %p86, %s87, %s88
      %p92 = pneg %p86
      %p93 = scmp.eq.s32.totalorder %s9, 1
      %p94 = por %p92, %p93
      %p95 = scmp.ne.s32.totalorder %s87, %s90
      %p96 = scmp.eq.s32.totalorder %s9, 0
      %p97 = por %p95, %p96
      %p98 = scmp.ne.s32.totalorder %s87, %s90
      %p99 = scmp.eq.s32.totalorder %s14, 1
      %p100 = por %p98, %p99
      %p101 = scmp.ne.s32.totalorder %s90, %s91
      %p102 = scmp.eq.s32.totalorder %s14, 0
      %p103 = por %p101, %p102
      %p104 = scmp.ne.s32.totalorder %s90, %s91
      %p105 = scmp.eq.s32.totalorder %s15, 1
      %p106 = por %p104, %p105
      %p108 = scmp.ne.s32.totalorder %s91, %s107
      %p109 = scmp.eq.s32.totalorder %s15, 0
      %p110 = por %p108, %p109
      %p111 = scmp.le.s32.totalorder 1, %s9
      %p112 = scmp.lt.s32.totalorder %s9, 3
      %p113 = pnand %p111, %p112
      %p114 = pneg %p113
      // Predicated region
      $region9: #{lenet5_forward.3} parent=5 // pred_check
        _
      $region10: #{lenet5_forward.3} parent=5 // pred_check_branch
        %116 = sbr.rel (%p113) target = $region12
      $region11: #{lenet5_forward.3} parent=5 // pred_region
        %s117 = ssub.s32 %s9, 1
        // Predicated region
        $region13: #{lenet5_forward.3} parent=11 // pred_check
          %p118 = pneg %p56
        $region14: #{lenet5_forward.3} parent=11 // pred_check_branch
          %120 = sbr.rel (%p118) target = $region16
        $region15: #{lenet5_forward.3} parent=11 // pred_region
          _
        $region16: #{lenet5_forward.3} parent=11 // pred_fallthru
          _
        // Predicated region
        $region17: #{lenet5_forward.3} parent=11 // pred_check
          %p121 = pneg %p77
        $region18: #{lenet5_forward.3} parent=11 // pred_check_branch
          %123 = sbr.rel (%p121) target = $region20
        $region19: #{lenet5_forward.3} parent=11 // pred_region
          _
        $region20: #{lenet5_forward.3} parent=11 // pred_fallthru
          _
      $region12: #{lenet5_forward.3} parent=5 // pred_fallthru
        _
      %p124 = scmp.lt.s32.totalorder %s9, 2
      // Predicated region
      $region21: #{lenet5_forward.3} parent=5 // pred_check
        %p125 = pneg %p124
      $region22: #{lenet5_forward.3} parent=5 // pred_check_branch
        %127 = sbr.rel (%p125) target = $region24
      $region23: #{lenet5_forward.3} parent=5 // pred_region
        // Predicated region
        $region25: #{lenet5_forward.3} parent=23 // pred_check
          %p128 = pneg %p29
        $region26: #{lenet5_forward.3} parent=23 // pred_check_branch
          %130 = sbr.rel (%p128) target = $region28
        $region27: #{lenet5_forward.3} parent=23 // pred_region
          %s131 = sand.u32 %s19, 1
          %s132 = sand.u32 %s19, 1
          %s133 = smul.addr %s132, 128
          %s134 = scalar_lea.vmem [#allocation2], %s133
          %s135 = smul.u32 2, %s9
          %s136 = smul.addr %s135, 4
          %s137 = scalar_lea.vmem %s0, %s136
          // Predicated region
          $region29: #{lenet5_forward.3} parent=27 // pred_check
            _
          $region30: #{lenet5_forward.3} parent=27 // pred_check_branch
            %139 = sbr.rel (0) target = $region32
          $region31: #{lenet5_forward.3} parent=27 // pred_region
            // Predicated region
            $region33: #{lenet5_forward.3} parent=31 // pred_check
              _
            $region34: #{lenet5_forward.3} parent=31 // pred_check_branch
              %141 = sbr.rel (0) target = $region36
            $region35: #{lenet5_forward.3} parent=31 // pred_region
              // Predicated region
              $region48: #{lenet5_forward.3} parent=35 // pred_check
                _
              $region49: #{lenet5_forward.3} parent=35 // pred_check_branch
                %186 = sbr.rel (0) target = $region51
              $region50: #{lenet5_forward.3} parent=35 // pred_region
                loop: start=0, step=1, limit=1
                $region52: #{lenet5_forward.3} parent=50 // loop_pre_header
                  _
                $region53: #{lenet5_forward.3} parent=50 // loop_header
                  %s188 = sphi 0, %s192
                  %p189 = scmp.ge.s32.totalorder %s188, 1
                  %s193 = sphi %s137, %s137
                  %s194 = sphi %s134, %s134
                $region54: #{lenet5_forward.3} parent=50 // loop_header_branch
                  %191 = sbr.rel (%p189) target = $region58
                $region55: #{lenet5_forward.3} parent=50 // loop_body
                  %v195 = vld [vmem:[%s193] sm:$0xff]
                  %196 = vst [vmem:[%s194] sm:$0xff] %v195
                  %v197 = vld [vmem:[%s193 + $0x10] sm:$0xff]
                  %198 = vst [vmem:[%s194 + $0x8] sm:$0xff] %v197
                  %v199 = vld [vmem:[%s193 + $0x20] sm:$0xff]
                  %200 = vst [vmem:[%s194 + $0x10] sm:$0xff] %v199
                  %v201 = vld [vmem:[%s193 + $0x30] sm:$0xff]
                  %202 = vst [vmem:[%s194 + $0x18] sm:$0xff] %v201
                  %v203 = vld [vmem:[%s193 + $0x40] sm:$0xff]
                  %204 = vst [vmem:[%s194 + $0x20] sm:$0xff] %v203
                  %v205 = vld [vmem:[%s193 + $0x50] sm:$0xff]
                  %206 = vst [vmem:[%s194 + $0x28] sm:$0xff] %v205
                  %v207 = vld [vmem:[%s193 + $0x60] sm:$0xff]
                  %208 = vst [vmem:[%s194 + $0x30] sm:$0xff] %v207
                  %v209 = vld [vmem:[%s193 + $0x70] sm:$0xff]
                  %210 = vst [vmem:[%s194 + $0x38] sm:$0xff] %v209
                  %v211 = vld [vmem:[%s193 + $0x80] sm:$0xff]
                  %212 = vst [vmem:[%s194 + $0x40] sm:$0xff] %v211
                  %v213 = vld [vmem:[%s193 + $0x90] sm:$0xff]
                  %214 = vst [vmem:[%s194 + $0x48] sm:$0xff] %v213
                  %v215 = vld [vmem:[%s193 + $0xa0] sm:$0xff]
                  %216 = vst [vmem:[%s194 + $0x50] sm:$0xff] %v215
                  %v217 = vld [vmem:[%s193 + $0xb0] sm:$0xff]
                  %218 = vst [vmem:[%s194 + $0x58] sm:$0xff] %v217
                  %v219 = vld [vmem:[%s193 + $0xc0] sm:$0xff]
                  %220 = vst [vmem:[%s194 + $0x60] sm:$0xff] %v219
                  %v221 = vld [vmem:[%s193 + $0xd0] sm:$0xff]
                  %222 = vst [vmem:[%s194 + $0x68] sm:$0xff] %v221
                  %v223 = vld [vmem:[%s193 + $0xe0] sm:$0xff]
                  %224 = vst [vmem:[%s194 + $0x70] sm:$0xff] %v223
                  %v225 = vld [vmem:[%s193 + $0xf0] sm:$0xff]
                  %226 = vst [vmem:[%s194 + $0x78] sm:$0xff] %v225
                $region56: #{lenet5_forward.3} parent=50 // loop_footer
                  %s192 = sadd.s32 1, %s188
                $region57: #{lenet5_forward.3} parent=50 // loop_footer_branch
                  %187 = sbr.rel target = $region53
                $region58: #{lenet5_forward.3} parent=50 // loop_exit
                  _
              $region51: #{lenet5_forward.3} parent=35 // pred_fallthru
                _
              // Predicated region
              $region59: #{lenet5_forward.3} parent=35 // pred_check
                _
              $region60: #{lenet5_forward.3} parent=35 // pred_check_branch
                %228 = sbr.rel target = $region62
              $region61: #{lenet5_forward.3} parent=35 // pred_region
                _
              $region62: #{lenet5_forward.3} parent=35 // pred_fallthru
                _
            $region36: #{lenet5_forward.3} parent=31 // pred_fallthru
              _
            // Predicated region
            $region37: #{lenet5_forward.3} parent=31 // pred_check
              _
            $region38: #{lenet5_forward.3} parent=31 // pred_check_branch
              %143 = sbr.rel target = $region40
            $region39: #{lenet5_forward.3} parent=31 // pred_region
              loop: start=0, step=1, limit=1
              $region41: #{lenet5_forward.3} parent=39 // loop_pre_header
                _
              $region42: #{lenet5_forward.3} parent=39 // loop_header
                %s146 = sphi 0, %s150
                %p147 = scmp.ge.s32.totalorder %s146, 1
                %s151 = sphi %s137, %s137
                %s152 = sphi %s134, %s134
              $region43: #{lenet5_forward.3} parent=39 // loop_header_branch
                %149 = sbr.rel (%p147) target = $region47
              $region44: #{lenet5_forward.3} parent=39 // loop_body
                %v153 = vld [vmem:[%s151] sm:$0xff]
                %154 = vst [vmem:[%s152] sm:$0xff] %v153
                %v155 = vld [vmem:[%s151 + $0x10] sm:$0xff]
                %156 = vst [vmem:[%s152 + $0x8] sm:$0xff] %v155
                %v157 = vld [vmem:[%s151 + $0x20] sm:$0xff]
                %158 = vst [vmem:[%s152 + $0x10] sm:$0xff] %v157
                %v159 = vld [vmem:[%s151 + $0x30] sm:$0xff]
                %160 = vst [vmem:[%s152 + $0x18] sm:$0xff] %v159
                %v161 = vld [vmem:[%s151 + $0x40] sm:$0xff]
                %162 = vst [vmem:[%s152 + $0x20] sm:$0xff] %v161
                %v163 = vld [vmem:[%s151 + $0x50] sm:$0xff]
                %164 = vst [vmem:[%s152 + $0x28] sm:$0xff] %v163
                %v165 = vld [vmem:[%s151 + $0x60] sm:$0xff]
                %166 = vst [vmem:[%s152 + $0x30] sm:$0xff] %v165
                %v167 = vld [vmem:[%s151 + $0x70] sm:$0xff]
                %168 = vst [vmem:[%s152 + $0x38] sm:$0xff] %v167
                %v169 = vld [vmem:[%s151 + $0x80] sm:$0xff]
                %170 = vst [vmem:[%s152 + $0x40] sm:$0xff] %v169
                %v171 = vld [vmem:[%s151 + $0x90] sm:$0xff]
                %172 = vst [vmem:[%s152 + $0x48] sm:$0xff] %v171
                %v173 = vld [vmem:[%s151 + $0xa0] sm:$0xff]
                %174 = vst [vmem:[%s152 + $0x50] sm:$0xff] %v173
                %v175 = vld [vmem:[%s151 + $0xb0] sm:$0xff]
                %176 = vst [vmem:[%s152 + $0x58] sm:$0xff] %v175
                %v177 = vld [vmem:[%s151 + $0xc0] sm:$0xff]
                %178 = vst [vmem:[%s152 + $0x60] sm:$0xff] %v177
                %v179 = vld [vmem:[%s151 + $0xd0] sm:$0xff]
                %180 = vst [vmem:[%s152 + $0x68] sm:$0xff] %v179
                %v181 = vld [vmem:[%s151 + $0xe0] sm:$0xff]
                %182 = vst [vmem:[%s152 + $0x70] sm:$0xff] %v181
                %v183 = vld [vmem:[%s151 + $0xf0] sm:$0xff]
                %184 = vst [vmem:[%s152 + $0x78] sm:$0xff] %v183
              $region45: #{lenet5_forward.3} parent=39 // loop_footer
                %s150 = sadd.s32 1, %s146
              $region46: #{lenet5_forward.3} parent=39 // loop_footer_branch
                %145 = sbr.rel target = $region42
              $region47: #{lenet5_forward.3} parent=39 // loop_exit
                _
            $region40: #{lenet5_forward.3} parent=31 // pred_fallthru
              _
          $region32: #{lenet5_forward.3} parent=27 // pred_fallthru
            _
          %229 = vnop
        $region28: #{lenet5_forward.3} parent=23 // pred_fallthru
          _
      $region24: #{lenet5_forward.3} parent=5 // pred_fallthru
        _
      %p230 = scmp.le.s32.totalorder 1, %s9
      %p231 = scmp.lt.s32.totalorder %s9, 3
      %p232 = pnand %p230, %p231
      %p233 = pneg %p232
      // Predicated region
      $region63: #{lenet5_forward.3} parent=5 // pred_check
        _
      $region64: #{lenet5_forward.3} parent=5 // pred_check_branch
        %235 = sbr.rel (%p232) target = $region66
      $region65: #{lenet5_forward.3} parent=5 // pred_region
        %s236 = ssub.s32 %s9, 1
        %s237 = sand.u32 %s22, 1
        %s238 = sand.u32 %s22, 1
        %s239 = smul.addr %s238, 128
        %s240 = scalar_lea.vmem [#allocation2], %s239
        // Predicated region
        $region67: #{lenet5_forward.3} parent=65 // pred_check
          %p241 = pneg %p35
        $region68: #{lenet5_forward.3} parent=65 // pred_check_branch
          %243 = sbr.rel (%p241) target = $region70
        $region69: #{lenet5_forward.3} parent=65 // pred_region
          _
        $region70: #{lenet5_forward.3} parent=65 // pred_fallthru
          _
        %s244 = sand.u32 %s22, 1
        %s245 = sand.u32 %s22, 1
        %s246 = smul.addr %s245, 128
        %s247 = scalar_lea.vmem [#allocation2], %s246
        %p248 = pneg %p35
        %p249 = pneg %p32
        %p250 = pneg %p56
        %p251 = pneg %p53
        %p252 = pneg %p77
        %p253 = pneg %p74
        %p254 = pneg %p103
        %p255 = pneg %p100
        %s256 = smul.u32 2, %s14
        %p257 = scmp.lt.s32.totalorder %s256, 3
        %s258 = scalar_select %p257, %s256, 3
        %s259 = smul.addr %s258, 8
        %s260 = scalar_lea.vmem %s3, %s259
        %s261 = smul.u32 2, %s14
        %s262 = smul.u32 2, %s14
        %p263 = scmp.lt.s32.totalorder %s262, 3
        %s264 = scalar_select %p263, %s262, 3
        %s265 = smul.addr %s264, 8
        %s266 = scalar_lea.vmem %s3, %s265
        %s267 = smul.u32 2, %s14
        %v269 = vld [vmem:[%s1] sm:$0x7]
        %v270 = vld [vmem:[%s240] sm:$0xff]
        %v271 = vld [vmem:[%s240 + $0x8] sm:$0xff]
        %v272 = vld [vmem:[%s240 + $0x10] sm:$0xff]
        %v273 = vld [vmem:[%s240 + $0x18] sm:$0xff]
        %v278 = vunpack.c.l.b16 %v270
        %v279 = vunpack.c.h.b16 %v270
        %v280 = vunpack.c.l.b16 %v271
        %v281 = vunpack.c.h.b16 %v271
        %v282 = vunpack.c.l.b16 %v272
        %v283 = vunpack.c.h.b16 %v272
        %v284 = vunpack.c.l.b16 %v273
        %v285 = vunpack.c.h.b16 %v273
        %v286 = vpack.c.b16 %v280, %v278
        %v287 = vpack.c.b16 %v281, %v279
        %v288 = vpack.c.b16 %v284, %v282
        %v289 = vpack.c.b16 %v285, %v283
        %vm294 = vcmask 261120
        %v296 = vsel %vm294, %v269, 0
        %298 = vmatprep.subr.bf16.mxu0 %v287
        %299 = vmatpush1.bf16.msra.mxu0 %v286
        %300 = vmatprep.subr.bf16.mxu0 %v289
        %301 = vmatpush1.bf16.msra.mxu0 %v288
        %302 = vmatprep.subr.bf16.mxu0 0
        %303 = vmatpush1.bf16.msra.mxu0 0
        %304 = vmatprep.subr.bf16.mxu0 0
        %305 = vmatpush1.bf16.msra.mxu0 0
        %306 = vmatprep.subr.bf16.mxu0 0
        %307 = vmatpush1.bf16.msra.mxu0 0
        %308 = vmatprep.subr.bf16.mxu0 0
        %309 = vmatpush1.bf16.msra.mxu0 0
        %310 = vmatprep.subr.bf16.mxu0 0
        %311 = vmatpush1.bf16.msra.mxu0 0
        %312 = vmatprep.subr.bf16.mxu0 0
        %313 = vmatpush1.bf16.msra.mxu0 0
        %314 = vmatprep.subr.bf16.mxu0 0
        %315 = vmatpush1.bf16.msra.mxu0 0
        %316 = vmatprep.subr.bf16.mxu0 0
        %317 = vmatpush1.bf16.msra.mxu0 0
        %318 = vmatprep.subr.bf16.mxu0 0
        %319 = vmatpush1.bf16.msra.mxu0 0
        %320 = vmatprep.subr.bf16.mxu0 0
        %321 = vmatpush1.bf16.msra.mxu0 0
        %322 = vmatprep.subr.bf16.mxu0 0
        %323 = vmatpush1.bf16.msra.mxu0 0
        %324 = vmatprep.subr.bf16.mxu0 0
        %325 = vmatpush1.bf16.msra.mxu0 0
        %326 = vmatprep.subr.bf16.mxu0 0
        %327 = vmatpush1.bf16.msra.mxu0 0
        %328 = vmatprep.subr.bf16.mxu0 0
        %329 = vmatpush1.bf16.msra.mxu0 0
        %330 = vmatprep.mubr.bf16.mxu0 0
        %331 = vmatmul.mubr.bf16.gmra.mrb[0].mxu0 %v296
        %v332 = vpop.f32.mrb[0].mxu0
        %v333 = vadd.f32 0.0, %v332
        %v334 = vpop.f32.mrb[0].mxu0
        %v335 = vadd.f32 0.0, %v334
        %v336 = vpop.f32.mrb[0].mxu0
        %v337 = vpop.f32.mrb[0].mxu0
        %338 = vdwg.mxu0
        %s339 = scalar_lea.vmem %s240, 32 [#allocation2]
        %v340 = vld [vmem:[%s339] sm:$0xff]
        %v341 = vld [vmem:[%s339 + $0x8] sm:$0xff]
        %v342 = vld [vmem:[%s339 + $0x10] sm:$0xff]
        %v343 = vld [vmem:[%s339 + $0x18] sm:$0xff]
        %v348 = vunpack.c.l.b16 %v340
        %v349 = vunpack.c.h.b16 %v340
        %v350 = vunpack.c.l.b16 %v341
        %v351 = vunpack.c.h.b16 %v341
        %v352 = vunpack.c.l.b16 %v342
        %v353 = vunpack.c.h.b16 %v342
        %v354 = vunpack.c.l.b16 %v343
        %v355 = vunpack.c.h.b16 %v343
        %v356 = vpack.c.b16 %v350, %v348
        %v357 = vpack.c.b16 %v351, %v349
        %v358 = vpack.c.b16 %v354, %v352
        %v359 = vpack.c.b16 %v355, %v353
        %364 = vmatprep.subr.bf16.mxu0 %v357
        %365 = vmatpush1.bf16.msra.mxu0 %v356
        %366 = vmatprep.subr.bf16.mxu0 %v359
        %367 = vmatpush1.bf16.msra.mxu0 %v358
        %368 = vmatprep.subr.bf16.mxu0 0
        %369 = vmatpush1.bf16.msra.mxu0 0
        %370 = vmatprep.subr.bf16.mxu0 0
        %371 = vmatpush1.bf16.msra.mxu0 0
        %372 = vmatprep.subr.bf16.mxu0 0
        %373 = vmatpush1.bf16.msra.mxu0 0
        %374 = vmatprep.subr.bf16.mxu0 0
        %375 = vmatpush1.bf16.msra.mxu0 0
        %376 = vmatprep.subr.bf16.mxu0 0
        %377 = vmatpush1.bf16.msra.mxu0 0
        %378 = vmatprep.subr.bf16.mxu0 0
        %379 = vmatpush1.bf16.msra.mxu0 0
        %380 = vmatprep.subr.bf16.mxu0 0
        %381 = vmatpush1.bf16.msra.mxu0 0
        %382 = vmatprep.subr.bf16.mxu0 0
        %383 = vmatpush1.bf16.msra.mxu0 0
        %384 = vmatprep.subr.bf16.mxu0 0
        %385 = vmatpush1.bf16.msra.mxu0 0
        %386 = vmatprep.subr.bf16.mxu0 0
        %387 = vmatpush1.bf16.msra.mxu0 0
        %388 = vmatprep.subr.bf16.mxu0 0
        %389 = vmatpush1.bf16.msra.mxu0 0
        %390 = vmatprep.subr.bf16.mxu0 0
        %391 = vmatpush1.bf16.msra.mxu0 0
        %392 = vmatprep.subr.bf16.mxu0 0
        %393 = vmatpush1.bf16.msra.mxu0 0
        %394 = vmatprep.subr.bf16.mxu0 0
        %395 = vmatpush1.bf16.msra.mxu0 0
        %396 = vmatprep.mubr.bf16.mxu0 0
        %397 = vmatmul.mubr.bf16.gmra.mrb[0].mxu0 %v296
        %v398 = vpop.f32.mrb[0].mxu0
        %v399 = vadd.f32 0.0, %v398
        %v400 = vpop.f32.mrb[0].mxu0
        %v401 = vadd.f32 0.0, %v400
        %v402 = vpop.f32.mrb[0].mxu0
        %v403 = vpop.f32.mrb[0].mxu0
        %404 = vdwg.mxu0
        %v405 = vmax.f32 %v333, %v399
        %v406 = vmax.f32 %v335, %v401
        %s407 = scalar_lea.vmem %s240, 64 [#allocation2]
        %v408 = vld [vmem:[%s407] sm:$0xff]
        %v409 = vld [vmem:[%s407 + $0x8] sm:$0xff]
        %v410 = vld [vmem:[%s407 + $0x10] sm:$0xff]
        %v411 = vld [vmem:[%s407 + $0x18] sm:$0xff]
        %v416 = vunpack.c.l.b16 %v408
        %v417 = vunpack.c.h.b16 %v408
        %v418 = vunpack.c.l.b16 %v409
        %v419 = vunpack.c.h.b16 %v409
        %v420 = vunpack.c.l.b16 %v410
        %v421 = vunpack.c.h.b16 %v410
        %v422 = vunpack.c.l.b16 %v411
        %v423 = vunpack.c.h.b16 %v411
        %v424 = vpack.c.b16 %v418, %v416
        %v425 = vpack.c.b16 %v419, %v417
        %v426 = vpack.c.b16 %v422, %v420
        %v427 = vpack.c.b16 %v423, %v421
        %432 = vmatprep.subr.bf16.mxu0 %v425
        %433 = vmatpush1.bf16.msra.mxu0 %v424
        %434 = vmatprep.subr.bf16.mxu0 %v427
        %435 = vmatpush1.bf16.msra.mxu0 %v426
        %436 = vmatprep.subr.bf16.mxu0 0
        %437 = vmatpush1.bf16.msra.mxu0 0
        %438 = vmatprep.subr.bf16.mxu0 0
        %439 = vmatpush1.bf16.msra.mxu0 0
        %440 = vmatprep.subr.bf16.mxu0 0
        %441 = vmatpush1.bf16.msra.mxu0 0
        %442 = vmatprep.subr.bf16.mxu0 0
        %443 = vmatpush1.bf16.msra.mxu0 0
        %444 = vmatprep.subr.bf16.mxu0 0
        %445 = vmatpush1.bf16.msra.mxu0 0
        %446 = vmatprep.subr.bf16.mxu0 0
        %447 = vmatpush1.bf16.msra.mxu0 0
        %448 = vmatprep.subr.bf16.mxu0 0
        %449 = vmatpush1.bf16.msra.mxu0 0
        %450 = vmatprep.subr.bf16.mxu0 0
        %451 = vmatpush1.bf16.msra.mxu0 0
        %452 = vmatprep.subr.bf16.mxu0 0
        %453 = vmatpush1.bf16.msra.mxu0 0
        %454 = vmatprep.subr.bf16.mxu0 0
        %455 = vmatpush1.bf16.msra.mxu0 0
        %456 = vmatprep.subr.bf16.mxu0 0
        %457 = vmatpush1.bf16.msra.mxu0 0
        %458 = vmatprep.subr.bf16.mxu0 0
        %459 = vmatpush1.bf16.msra.mxu0 0
        %460 = vmatprep.subr.bf16.mxu0 0
        %461 = vmatpush1.bf16.msra.mxu0 0
        %462 = vmatprep.subr.bf16.mxu0 0
        %463 = vmatpush1.bf16.msra.mxu0 0
        %464 = vmatprep.mubr.bf16.mxu0 0
        %465 = vmatmul.mubr.bf16.gmra.mrb[0].mxu0 %v296
        %v466 = vpop.f32.mrb[0].mxu0
        %v467 = vadd.f32 0.0, %v466
        %v468 = vpop.f32.mrb[0].mxu0
        %v469 = vadd.f32 0.0, %v468
        %v470 = vpop.f32.mrb[0].mxu0
        %v471 = vpop.f32.mrb[0].mxu0
        %472 = vdwg.mxu0
        %v473 = vmax.f32 %v405, %v467
        %v474 = vmax.f32 %v406, %v469
        %s475 = scalar_lea.vmem %s240, 96 [#allocation2]
        %v476 = vld [vmem:[%s475] sm:$0xff]
        %v477 = vld [vmem:[%s475 + $0x8] sm:$0xff]
        %v478 = vld [vmem:[%s475 + $0x10] sm:$0xff]
        %v479 = vld [vmem:[%s475 + $0x18] sm:$0xff]
        %v484 = vunpack.c.l.b16 %v476
        %v485 = vunpack.c.h.b16 %v476
        %v486 = vunpack.c.l.b16 %v477
        %v487 = vunpack.c.h.b16 %v477
        %v488 = vunpack.c.l.b16 %v478
        %v489 = vunpack.c.h.b16 %v478
        %v490 = vunpack.c.l.b16 %v479
        %v491 = vunpack.c.h.b16 %v479
        %v492 = vpack.c.b16 %v486, %v484
        %v493 = vpack.c.b16 %v487, %v485
        %v494 = vpack.c.b16 %v490, %v488
        %v495 = vpack.c.b16 %v491, %v489
        %500 = vmatprep.subr.bf16.mxu0 %v493
        %501 = vmatpush1.bf16.msra.mxu0 %v492
        %502 = vmatprep.subr.bf16.mxu0 %v495
        %503 = vmatpush1.bf16.msra.mxu0 %v494
        %504 = vmatprep.subr.bf16.mxu0 0
        %505 = vmatpush1.bf16.msra.mxu0 0
        %506 = vmatprep.subr.bf16.mxu0 0
        %507 = vmatpush1.bf16.msra.mxu0 0
        %508 = vmatprep.subr.bf16.mxu0 0
        %509 = vmatpush1.bf16.msra.mxu0 0
        %510 = vmatprep.subr.bf16.mxu0 0
        %511 = vmatpush1.bf16.msra.mxu0 0
        %512 = vmatprep.subr.bf16.mxu0 0
        %513 = vmatpush1.bf16.msra.mxu0 0
        %514 = vmatprep.subr.bf16.mxu0 0
        %515 = vmatpush1.bf16.msra.mxu0 0
        %516 = vmatprep.subr.bf16.mxu0 0
        %517 = vmatpush1.bf16.msra.mxu0 0
        %518 = vmatprep.subr.bf16.mxu0 0
        %519 = vmatpush1.bf16.msra.mxu0 0
        %520 = vmatprep.subr.bf16.mxu0 0
        %521 = vmatpush1.bf16.msra.mxu0 0
        %522 = vmatprep.subr.bf16.mxu0 0
        %523 = vmatpush1.bf16.msra.mxu0 0
        %524 = vmatprep.subr.bf16.mxu0 0
        %525 = vmatpush1.bf16.msra.mxu0 0
        %526 = vmatprep.subr.bf16.mxu0 0
        %527 = vmatpush1.bf16.msra.mxu0 0
        %528 = vmatprep.subr.bf16.mxu0 0
        %529 = vmatpush1.bf16.msra.mxu0 0
        %530 = vmatprep.subr.bf16.mxu0 0
        %531 = vmatpush1.bf16.msra.mxu0 0
        %532 = vmatprep.mubr.bf16.mxu0 0
        %533 = vmatmul.mubr.bf16.gmra.mrb[0].mxu0 %v296
        %v534 = vpop.f32.mrb[0].mxu0
        %v535 = vadd.f32 0.0, %v534
        %v536 = vpop.f32.mrb[0].mxu0
        %v537 = vadd.f32 0.0, %v536
        %v538 = vpop.f32.mrb[0].mxu0
        %v539 = vpop.f32.mrb[0].mxu0
        %540 = vdwg.mxu0
        %v541 = vmax.f32 %v473, %v535
        %v542 = vmax.f32 %v474, %v537
        %v543 = vld [vmem:[%s2] sm:$0x3f]
        %545 = vset.pattern.permute.xlu0 0
        %546 = vperm.xlu0 %545, %v543
        %v547 = vpop.permute.xlu0 %546
        %v549 = vadd.f32 %v541, %v547
        %v550 = vadd.f32 %v542, %v547
        %v551 = vmax.f32 %v549, 0.0
        %v552 = vmax.f32 %v550, 0.0
        %553 = vst [vmem:[%s266] sm:$0x3f] %v551
        %554 = vst [vmem:[%s266 + $0x8] sm:$0x3f] %v552
        %s555 = smul.u32 2, %s14
        %p556 = scmp.lt.s32.totalorder %s555, 3
        %s557 = scalar_select %p556, %s555, 3
        %s558 = smul.addr %s557, 8
        %s559 = scalar_lea.vmem %s3, %s558
        // Predicated region
        $region71: #{lenet5_forward.3} parent=65 // pred_check
          %p560 = pneg %p100
        $region72: #{lenet5_forward.3} parent=65 // pred_check_branch
          %562 = sbr.rel (%p560) target = $region74
        $region73: #{lenet5_forward.3} parent=65 // pred_region
          %s563 = smul.u32 2, %s14
        $region74: #{lenet5_forward.3} parent=65 // pred_fallthru
          _
      $region66: #{lenet5_forward.3} parent=5 // pred_fallthru
        _
      %p564 = scmp.le.s32.totalorder 2, %s9
      // Predicated region
      $region75: #{lenet5_forward.3} parent=5 // pred_check
        %p565 = pneg %p564
      $region76: #{lenet5_forward.3} parent=5 // pred_check_branch
        %567 = sbr.rel (%p565) target = $region78
      $region77: #{lenet5_forward.3} parent=5 // pred_region
        %s568 = ssub.s32 %s9, 2
        // Predicated region
        $region79: #{lenet5_forward.3} parent=77 // pred_check
          %p569 = pneg %p106
        $region80: #{lenet5_forward.3} parent=77 // pred_check_branch
          %571 = sbr.rel (%p569) target = $region82
        $region81: #{lenet5_forward.3} parent=77 // pred_region
          %s572 = smul.u32 2, %s15
          %p573 = scmp.lt.s32.totalorder %s572, 3
          %s574 = scalar_select %p573, %s572, 3
          %s575 = smul.addr %s574, 8
          %s576 = scalar_lea.vmem %s3, %s575
        $region82: #{lenet5_forward.3} parent=77 // pred_fallthru
          _
      $region78: #{lenet5_forward.3} parent=5 // pred_fallthru
        _
    $region6: #{lenet5_forward.3} parent=1 // loop_footer
      %s13 = sadd.s32 1, %s9
    $region7: #{lenet5_forward.3} parent=1 // loop_footer_branch
      %8 = sbr.rel target = $region3
    $region8: #{lenet5_forward.3} parent=1 // loop_exit
      _

// kernel: lenet5_forward.4
$region0: #{lenet5_forward.4}
  #allocation0 [shape = 'u32[]', space=smem, size = 0x4, offset = 0x4, fixed_abs, tag = 'smem constant byte address 0x4 - core index']
  #allocation1 [shape = 'u32[144,128]{1,0:T(1,128)}', space=vmem, size = 0x12000, scoped, tag = 'internal scratch']
  %s0 = inlined_call_operand.vmem [shape: bf16[4,160,128], index: 0, kind: input, shape index: {}]
  %s1 = inlined_call_operand.vmem [shape: bf16[16,160], index: 1, kind: input, shape index: {}]
  %s2 = inlined_call_operand.vmem [shape: f32[16,1], index: 2, kind: input, shape index: {}]
  %s3 = inlined_call_operand.vmem [shape: f32[16,128], index: 3, kind: output, shape index: {}]
  %s4 = sld [smem:[#allocation0]]
  $region22: #{lenet5_forward.4} parent=0
    _
  %s6 = ssub.s32 1, %s4
  %s7 = scalar_select 0, %s6, %s4
  // Predicated region
  $region2: #{lenet5_forward.4} parent=0 // pred_check
    _
  $region3: #{lenet5_forward.4} parent=0 // pred_check_branch
    %9 = sbr.rel (0) target = $region5
  $region4: #{lenet5_forward.4} parent=0 // pred_region
    _
  $region5: #{lenet5_forward.4} parent=0 // pred_fallthru
    _
  // Predicated region
  $region6: #{lenet5_forward.4} parent=0 // pred_check
    _
  $region7: #{lenet5_forward.4} parent=0 // pred_check_branch
    %11 = sbr.rel (0) target = $region9
  $region8: #{lenet5_forward.4} parent=0 // pred_region
    _
  $region9: #{lenet5_forward.4} parent=0 // pred_fallthru
    _
  // Predicated region
  $region10: #{lenet5_forward.4} parent=0 // pred_check
    _
  $region11: #{lenet5_forward.4} parent=0 // pred_check_branch
    %13 = sbr.rel (0) target = $region13
  $region12: #{lenet5_forward.4} parent=0 // pred_region
    _
  $region13: #{lenet5_forward.4} parent=0 // pred_fallthru
    _
  %v15 = vld [vmem:[%s1] sm:$0xff]
  %v16 = vld [vmem:[%s1 + $0x8] sm:$0xff]
  %v17 = vld [vmem:[%s0] sm:$0xf]
  %v18 = vld [vmem:[%s0 + $0x4] sm:$0xf]
  %v19 = vld [vmem:[%s0 + $0x8] sm:$0xf]
  %v20 = vld [vmem:[%s0 + $0xc] sm:$0xf]
  %v21 = vld [vmem:[%s0 + $0x10] sm:$0xf]
  %v22 = vld [vmem:[%s0 + $0x14] sm:$0xf]
  %v23 = vld [vmem:[%s0 + $0x18] sm:$0xf]
  %v24 = vld [vmem:[%s0 + $0x1c] sm:$0xf]
  %v25 = vld [vmem:[%s0 + $0x20] sm:$0xf]
  %v26 = vld [vmem:[%s0 + $0x24] sm:$0xf]
  %v27 = vld [vmem:[%s0 + $0x28] sm:$0xf]
  %v28 = vld [vmem:[%s0 + $0x2c] sm:$0xf]
  %v29 = vld [vmem:[%s0 + $0x30] sm:$0xf]
  %v30 = vld [vmem:[%s0 + $0x34] sm:$0xf]
  %v31 = vld [vmem:[%s0 + $0x38] sm:$0xf]
  %v32 = vld [vmem:[%s0 + $0x3c] sm:$0xf]
  %v33 = vld [vmem:[%s0 + $0x40] sm:$0xf]
  %v34 = vld [vmem:[%s0 + $0x44] sm:$0xf]
  %v35 = vld [vmem:[%s0 + $0x48] sm:$0xf]
  %v36 = vld [vmem:[%s0 + $0x4c] sm:$0xf]
  %v39 = vunpack.c.l.b16 %v15
  %v40 = vunpack.c.h.b16 %v15
  %v41 = vunpack.c.l.b16 %v16
  %v42 = vunpack.c.h.b16 %v16
  %v43 = vpack.c.b16 %v41, %v39
  %v44 = vpack.c.b16 %v42, %v40
  %v66 = vunpack.c.l.b16 %v17
  %v67 = vunpack.c.l.b16 %v18
  %v68 = vunpack.c.l.b16 %v19
  %v69 = vunpack.c.l.b16 %v20
  %v70 = vunpack.c.l.b16 %v21
  %v71 = vunpack.c.l.b16 %v22
  %v72 = vunpack.c.l.b16 %v23
  %v73 = vunpack.c.l.b16 %v24
  %v74 = vunpack.c.l.b16 %v25
  %v75 = vunpack.c.l.b16 %v26
  %v76 = vunpack.c.l.b16 %v27
  %v77 = vunpack.c.l.b16 %v28
  %v78 = vunpack.c.l.b16 %v29
  %v79 = vunpack.c.l.b16 %v30
  %v80 = vunpack.c.l.b16 %v31
  %v81 = vunpack.c.l.b16 %v32
  %v82 = vunpack.c.l.b16 %v33
  %v83 = vunpack.c.l.b16 %v34
  %v84 = vunpack.c.l.b16 %v35
  %v85 = vunpack.c.l.b16 %v36
  %v86 = vpack.c.b16 %v67, %v66
  %v87 = vpack.c.b16 %v69, %v68
  %v88 = vpack.c.b16 %v71, %v70
  %v89 = vpack.c.b16 %v73, %v72
  %v90 = vpack.c.b16 %v75, %v74
  %v91 = vpack.c.b16 %v77, %v76
  %v92 = vpack.c.b16 %v79, %v78
  %v93 = vpack.c.b16 %v81, %v80
  %v94 = vpack.c.b16 %v83, %v82
  %v95 = vpack.c.b16 %v85, %v84
  %vm106 = vcmask 261120
  %v108 = vsel %vm106, %v44, 0
  %110 = vmatprep.subr.bf16.mxu0 0
  %111 = vmatpush1.bf16.msra.mxu0 %v86
  %112 = vmatprep.subr.bf16.mxu0 0
  %113 = vmatpush1.bf16.msra.mxu0 %v87
  %114 = vmatprep.subr.bf16.mxu0 0
  %115 = vmatpush1.bf16.msra.mxu0 %v88
  %116 = vmatprep.subr.bf16.mxu0 0
  %117 = vmatpush1.bf16.msra.mxu0 %v89
  %118 = vmatprep.subr.bf16.mxu0 0
  %119 = vmatpush1.bf16.msra.mxu0 %v90
  %120 = vmatprep.subr.bf16.mxu0 0
  %121 = vmatpush1.bf16.msra.mxu0 %v91
  %122 = vmatprep.subr.bf16.mxu0 0
  %123 = vmatpush1.bf16.msra.mxu0 %v92
  %124 = vmatprep.subr.bf16.mxu0 0
  %125 = vmatpush1.bf16.msra.mxu0 %v93
  %126 = vmatprep.subr.bf16.mxu0 0
  %127 = vmatpush1.bf16.msra.mxu0 %v94
  %128 = vmatprep.subr.bf16.mxu0 0
  %129 = vmatpush1.bf16.msra.mxu0 %v95
  %130 = vmatprep.subr.bf16.mxu0 0
  %131 = vmatpush1.bf16.msra.mxu0 0
  %132 = vmatprep.subr.bf16.mxu0 0
  %133 = vmatpush1.bf16.msra.mxu0 0
  %134 = vmatprep.subr.bf16.mxu0 0
  %135 = vmatpush1.bf16.msra.mxu0 0
  %136 = vmatprep.subr.bf16.mxu0 0
  %137 = vmatpush1.bf16.msra.mxu0 0
  %138 = vmatprep.subr.bf16.mxu0 0
  %139 = vmatpush1.bf16.msra.mxu0 0
  %140 = vmatprep.subr.bf16.mxu0 0
  %141 = vmatpush1.bf16.msra.mxu0 0
  %142 = vmatprep.mubr.bf16.mxu0 %v108
  %143 = vmatmul.mubr.bf16.gmra.mrb[0].mxu0 %v43
  %v144 = vpop.f32.mrb[0].mxu0
  %v145 = vadd.f32 0.0, %v144
  %v146 = vpop.f32.mrb[0].mxu0
  %v147 = vpop.f32.mrb[0].mxu0
  %v148 = vadd.f32 0.0, %v147
  %v149 = vpop.f32.mrb[0].mxu0
  %150 = vdwg.mxu0
  %s151 = scalar_lea.vmem %s0, 80
  %v152 = vld [vmem:[%s151] sm:$0xf]
  %v153 = vld [vmem:[%s151 + $0x4] sm:$0xf]
  %v154 = vld [vmem:[%s151 + $0x8] sm:$0xf]
  %v155 = vld [vmem:[%s151 + $0xc] sm:$0xf]
  %v156 = vld [vmem:[%s151 + $0x10] sm:$0xf]
  %v157 = vld [vmem:[%s151 + $0x14] sm:$0xf]
  %v158 = vld [vmem:[%s151 + $0x18] sm:$0xf]
  %v159 = vld [vmem:[%s151 + $0x1c] sm:$0xf]
  %v160 = vld [vmem:[%s151 + $0x20] sm:$0xf]
  %v161 = vld [vmem:[%s151 + $0x24] sm:$0xf]
  %v162 = vld [vmem:[%s151 + $0x28] sm:$0xf]
  %v163 = vld [vmem:[%s151 + $0x2c] sm:$0xf]
  %v164 = vld [vmem:[%s151 + $0x30] sm:$0xf]
  %v165 = vld [vmem:[%s151 + $0x34] sm:$0xf]
  %v166 = vld [vmem:[%s151 + $0x38] sm:$0xf]
  %v167 = vld [vmem:[%s151 + $0x3c] sm:$0xf]
  %v168 = vld [vmem:[%s151 + $0x40] sm:$0xf]
  %v169 = vld [vmem:[%s151 + $0x44] sm:$0xf]
  %v170 = vld [vmem:[%s151 + $0x48] sm:$0xf]
  %v171 = vld [vmem:[%s151 + $0x4c] sm:$0xf]
  %v192 = vunpack.c.l.b16 %v152
  %v193 = vunpack.c.l.b16 %v153
  %v194 = vunpack.c.l.b16 %v154
  %v195 = vunpack.c.l.b16 %v155
  %v196 = vunpack.c.l.b16 %v156
  %v197 = vunpack.c.l.b16 %v157
  %v198 = vunpack.c.l.b16 %v158
  %v199 = vunpack.c.l.b16 %v159
  %v200 = vunpack.c.l.b16 %v160
  %v201 = vunpack.c.l.b16 %v161
  %v202 = vunpack.c.l.b16 %v162
  %v203 = vunpack.c.l.b16 %v163
  %v204 = vunpack.c.l.b16 %v164
  %v205 = vunpack.c.l.b16 %v165
  %v206 = vunpack.c.l.b16 %v166
  %v207 = vunpack.c.l.b16 %v167
  %v208 = vunpack.c.l.b16 %v168
  %v209 = vunpack.c.l.b16 %v169
  %v210 = vunpack.c.l.b16 %v170
  %v211 = vunpack.c.l.b16 %v171
  %v212 = vpack.c.b16 %v193, %v192
  %v213 = vpack.c.b16 %v195, %v194
  %v214 = vpack.c.b16 %v197, %v196
  %v215 = vpack.c.b16 %v199, %v198
  %v216 = vpack.c.b16 %v201, %v200
  %v217 = vpack.c.b16 %v203, %v202
  %v218 = vpack.c.b16 %v205, %v204
  %v219 = vpack.c.b16 %v207, %v206
  %v220 = vpack.c.b16 %v209, %v208
  %v221 = vpack.c.b16 %v211, %v210
  %232 = vmatprep.subr.bf16.mxu0 0
  %233 = vmatpush1.bf16.msra.mxu0 %v212
  %234 = vmatprep.subr.bf16.mxu0 0
  %235 = vmatpush1.bf16.msra.mxu0 %v213
  %236 = vmatprep.subr.bf16.mxu0 0
  %237 = vmatpush1.bf16.msra.mxu0 %v214
  %238 = vmatprep.subr.bf16.mxu0 0
  %239 = vmatpush1.bf16.msra.mxu0 %v215
  %240 = vmatprep.subr.bf16.mxu0 0
  %241 = vmatpush1.bf16.msra.mxu0 %v216
  %242 = vmatprep.subr.bf16.mxu0 0
  %243 = vmatpush1.bf16.msra.mxu0 %v217
  %244 = vmatprep.subr.bf16.mxu0 0
  %245 = vmatpush1.bf16.msra.mxu0 %v218
  %246 = vmatprep.subr.bf16.mxu0 0
  %247 = vmatpush1.bf16.msra.mxu0 %v219
  %248 = vmatprep.subr.bf16.mxu0 0
  %249 = vmatpush1.bf16.msra.mxu0 %v220
  %250 = vmatprep.subr.bf16.mxu0 0
  %251 = vmatpush1.bf16.msra.mxu0 %v221
  %252 = vmatprep.subr.bf16.mxu0 0
  %253 = vmatpush1.bf16.msra.mxu0 0
  %254 = vmatprep.subr.bf16.mxu0 0
  %255 = vmatpush1.bf16.msra.mxu0 0
  %256 = vmatprep.subr.bf16.mxu0 0
  %257 = vmatpush1.bf16.msra.mxu0 0
  %258 = vmatprep.subr.bf16.mxu0 0
  %259 = vmatpush1.bf16.msra.mxu0 0
  %260 = vmatprep.subr.bf16.mxu0 0
  %261 = vmatpush1.bf16.msra.mxu0 0
  %262 = vmatprep.subr.bf16.mxu0 0
  %263 = vmatpush1.bf16.msra.mxu0 0
  %264 = vmatprep.mubr.bf16.mxu0 %v108
  %265 = vmatmul.mubr.bf16.gmra.mrb[0].mxu0 %v43
  %v266 = vpop.f32.mrb[0].mxu0
  %v267 = vadd.f32 0.0, %v266
  %v268 = vpop.f32.mrb[0].mxu0
  %v269 = vpop.f32.mrb[0].mxu0
  %v270 = vadd.f32 0.0, %v269
  %v271 = vpop.f32.mrb[0].mxu0
  %272 = vdwg.mxu0
  %v273 = vmax.f32 %v145, %v267
  %v274 = vmax.f32 %v148, %v270
  %s275 = scalar_lea.vmem %s0, 160
  %v276 = vld [vmem:[%s275] sm:$0xf]
  %v277 = vld [vmem:[%s275 + $0x4] sm:$0xf]
  %v278 = vld [vmem:[%s275 + $0x8] sm:$0xf]
  %v279 = vld [vmem:[%s275 + $0xc] sm:$0xf]
  %v280 = vld [vmem:[%s275 + $0x10] sm:$0xf]
  %v281 = vld [vmem:[%s275 + $0x14] sm:$0xf]
  %v282 = vld [vmem:[%s275 + $0x18] sm:$0xf]
  %v283 = vld [vmem:[%s275 + $0x1c] sm:$0xf]
  %v284 = vld [vmem:[%s275 + $0x20] sm:$0xf]
  %v285 = vld [vmem:[%s275 + $0x24] sm:$0xf]
  %v286 = vld [vmem:[%s275 + $0x28] sm:$0xf]
  %v287 = vld [vmem:[%s275 + $0x2c] sm:$0xf]
  %v288 = vld [vmem:[%s275 + $0x30] sm:$0xf]
  %v289 = vld [vmem:[%s275 + $0x34] sm:$0xf]
  %v290 = vld [vmem:[%s275 + $0x38] sm:$0xf]
  %v291 = vld [vmem:[%s275 + $0x3c] sm:$0xf]
  %v292 = vld [vmem:[%s275 + $0x40] sm:$0xf]
  %v293 = vld [vmem:[%s275 + $0x44] sm:$0xf]
  %v294 = vld [vmem:[%s275 + $0x48] sm:$0xf]
  %v295 = vld [vmem:[%s275 + $0x4c] sm:$0xf]
  %v316 = vunpack.c.l.b16 %v276
  %v317 = vunpack.c.l.b16 %v277
  %v318 = vunpack.c.l.b16 %v278
  %v319 = vunpack.c.l.b16 %v279
  %v320 = vunpack.c.l.b16 %v280
  %v321 = vunpack.c.l.b16 %v281
  %v322 = vunpack.c.l.b16 %v282
  %v323 = vunpack.c.l.b16 %v283
  %v324 = vunpack.c.l.b16 %v284
  %v325 = vunpack.c.l.b16 %v285
  %v326 = vunpack.c.l.b16 %v286
  %v327 = vunpack.c.l.b16 %v287
  %v328 = vunpack.c.l.b16 %v288
  %v329 = vunpack.c.l.b16 %v289
  %v330 = vunpack.c.l.b16 %v290
  %v331 = vunpack.c.l.b16 %v291
  %v332 = vunpack.c.l.b16 %v292
  %v333 = vunpack.c.l.b16 %v293
  %v334 = vunpack.c.l.b16 %v294
  %v335 = vunpack.c.l.b16 %v295
  %v336 = vpack.c.b16 %v317, %v316
  %v337 = vpack.c.b16 %v319, %v318
  %v338 = vpack.c.b16 %v321, %v320
  %v339 = vpack.c.b16 %v323, %v322
  %v340 = vpack.c.b16 %v325, %v324
  %v341 = vpack.c.b16 %v327, %v326
  %v342 = vpack.c.b16 %v329, %v328
  %v343 = vpack.c.b16 %v331, %v330
  %v344 = vpack.c.b16 %v333, %v332
  %v345 = vpack.c.b16 %v335, %v334
  %356 = vmatprep.subr.bf16.mxu0 0
  %357 = vmatpush1.bf16.msra.mxu0 %v336
  %358 = vmatprep.subr.bf16.mxu0 0
  %359 = vmatpush1.bf16.msra.mxu0 %v337
  %360 = vmatprep.subr.bf16.mxu0 0
  %361 = vmatpush1.bf16.msra.mxu0 %v338
  %362 = vmatprep.subr.bf16.mxu0 0
  %363 = vmatpush1.bf16.msra.mxu0 %v339
  %364 = vmatprep.subr.bf16.mxu0 0
  %365 = vmatpush1.bf16.msra.mxu0 %v340
  %366 = vmatprep.subr.bf16.mxu0 0
  %367 = vmatpush1.bf16.msra.mxu0 %v341
  %368 = vmatprep.subr.bf16.mxu0 0
  %369 = vmatpush1.bf16.msra.mxu0 %v342
  %370 = vmatprep.subr.bf16.mxu0 0
  %371 = vmatpush1.bf16.msra.mxu0 %v343
  %372 = vmatprep.subr.bf16.mxu0 0
  %373 = vmatpush1.bf16.msra.mxu0 %v344
  %374 = vmatprep.subr.bf16.mxu0 0
  %375 = vmatpush1.bf16.msra.mxu0 %v345
  %376 = vmatprep.subr.bf16.mxu0 0
  %377 = vmatpush1.bf16.msra.mxu0 0
  %378 = vmatprep.subr.bf16.mxu0 0
  %379 = vmatpush1.bf16.msra.mxu0 0
  %380 = vmatprep.subr.bf16.mxu0 0
  %381 = vmatpush1.bf16.msra.mxu0 0
  %382 = vmatprep.subr.bf16.mxu0 0
  %383 = vmatpush1.bf16.msra.mxu0 0
  %384 = vmatprep.subr.bf16.mxu0 0
  %385 = vmatpush1.bf16.msra.mxu0 0
  %386 = vmatprep.subr.bf16.mxu0 0
  %387 = vmatpush1.bf16.msra.mxu0 0
  %388 = vmatprep.mubr.bf16.mxu0 %v108
  %389 = vmatmul.mubr.bf16.gmra.mrb[0].mxu0 %v43
  %v390 = vpop.f32.mrb[0].mxu0
  %v391 = vadd.f32 0.0, %v390
  %v392 = vpop.f32.mrb[0].mxu0
  %v393 = vpop.f32.mrb[0].mxu0
  %v394 = vadd.f32 0.0, %v393
  %v395 = vpop.f32.mrb[0].mxu0
  %396 = vdwg.mxu0
  %v397 = vmax.f32 %v273, %v391
  %v398 = vmax.f32 %v274, %v394
  %s399 = scalar_lea.vmem %s0, 240
  %v400 = vld [vmem:[%s399] sm:$0xf]
  %v401 = vld [vmem:[%s399 + $0x4] sm:$0xf]
  %v402 = vld [vmem:[%s399 + $0x8] sm:$0xf]
  %v403 = vld [vmem:[%s399 + $0xc] sm:$0xf]
  %v404 = vld [vmem:[%s399 + $0x10] sm:$0xf]
  %v405 = vld [vmem:[%s399 + $0x14] sm:$0xf]
  %v406 = vld [vmem:[%s399 + $0x18] sm:$0xf]
  %v407 = vld [vmem:[%s399 + $0x1c] sm:$0xf]
  %v408 = vld [vmem:[%s399 + $0x20] sm:$0xf]
  %v409 = vld [vmem:[%s399 + $0x24] sm:$0xf]
  %v410 = vld [vmem:[%s399 + $0x28] sm:$0xf]
  %v411 = vld [vmem:[%s399 + $0x2c] sm:$0xf]
  %v412 = vld [vmem:[%s399 + $0x30] sm:$0xf]
  %v413 = vld [vmem:[%s399 + $0x34] sm:$0xf]
  %v414 = vld [vmem:[%s399 + $0x38] sm:$0xf]
  %v415 = vld [vmem:[%s399 + $0x3c] sm:$0xf]
  %v416 = vld [vmem:[%s399 + $0x40] sm:$0xf]
  %v417 = vld [vmem:[%s399 + $0x44] sm:$0xf]
  %v418 = vld [vmem:[%s399 + $0x48] sm:$0xf]
  %v419 = vld [vmem:[%s399 + $0x4c] sm:$0xf]
  %v440 = vunpack.c.l.b16 %v400
  %v441 = vunpack.c.l.b16 %v401
  %v442 = vunpack.c.l.b16 %v402
  %v443 = vunpack.c.l.b16 %v403
  %v444 = vunpack.c.l.b16 %v404
  %v445 = vunpack.c.l.b16 %v405
  %v446 = vunpack.c.l.b16 %v406
  %v447 = vunpack.c.l.b16 %v407
  %v448 = vunpack.c.l.b16 %v408
  %v449 = vunpack.c.l.b16 %v409
  %v450 = vunpack.c.l.b16 %v410
  %v451 = vunpack.c.l.b16 %v411
  %v452 = vunpack.c.l.b16 %v412
  %v453 = vunpack.c.l.b16 %v413
  %v454 = vunpack.c.l.b16 %v414
  %v455 = vunpack.c.l.b16 %v415
  %v456 = vunpack.c.l.b16 %v416
  %v457 = vunpack.c.l.b16 %v417
  %v458 = vunpack.c.l.b16 %v418
  %v459 = vunpack.c.l.b16 %v419
  %v460 = vpack.c.b16 %v441, %v440
  %v461 = vpack.c.b16 %v443, %v442
  %v462 = vpack.c.b16 %v445, %v444
  %v463 = vpack.c.b16 %v447, %v446
  %v464 = vpack.c.b16 %v449, %v448
  %v465 = vpack.c.b16 %v451, %v450
  %v466 = vpack.c.b16 %v453, %v452
  %v467 = vpack.c.b16 %v455, %v454
  %v468 = vpack.c.b16 %v457, %v456
  %v469 = vpack.c.b16 %v459, %v458
  %480 = vmatprep.subr.bf16.mxu0 0
  %481 = vmatpush1.bf16.msra.mxu0 %v460
  %482 = vmatprep.subr.bf16.mxu0 0
  %483 = vmatpush1.bf16.msra.mxu0 %v461
  %484 = vmatprep.subr.bf16.mxu0 0
  %485 = vmatpush1.bf16.msra.mxu0 %v462
  %486 = vmatprep.subr.bf16.mxu0 0
  %487 = vmatpush1.bf16.msra.mxu0 %v463
  %488 = vmatprep.subr.bf16.mxu0 0
  %489 = vmatpush1.bf16.msra.mxu0 %v464
  %490 = vmatprep.subr.bf16.mxu0 0
  %491 = vmatpush1.bf16.msra.mxu0 %v465
  %492 = vmatprep.subr.bf16.mxu0 0
  %493 = vmatpush1.bf16.msra.mxu0 %v466
  %494 = vmatprep.subr.bf16.mxu0 0
  %495 = vmatpush1.bf16.msra.mxu0 %v467
  %496 = vmatprep.subr.bf16.mxu0 0
  %497 = vmatpush1.bf16.msra.mxu0 %v468
  %498 = vmatprep.subr.bf16.mxu0 0
  %499 = vmatpush1.bf16.msra.mxu0 %v469
  %500 = vmatprep.subr.bf16.mxu0 0
  %501 = vmatpush1.bf16.msra.mxu0 0
  %502 = vmatprep.subr.bf16.mxu0 0
  %503 = vmatpush1.bf16.msra.mxu0 0
  %504 = vmatprep.subr.bf16.mxu0 0
  %505 = vmatpush1.bf16.msra.mxu0 0
  %506 = vmatprep.subr.bf16.mxu0 0
  %507 = vmatpush1.bf16.msra.mxu0 0
  %508 = vmatprep.subr.bf16.mxu0 0
  %509 = vmatpush1.bf16.msra.mxu0 0
  %510 = vmatprep.subr.bf16.mxu0 0
  %511 = vmatpush1.bf16.msra.mxu0 0
  %512 = vmatprep.mubr.bf16.mxu0 %v108
  %513 = vmatmul.mubr.bf16.gmra.mrb[0].mxu0 %v43
  %v514 = vpop.f32.mrb[0].mxu0
  %v515 = vadd.f32 0.0, %v514
  %v516 = vpop.f32.mrb[0].mxu0
  %v517 = vpop.f32.mrb[0].mxu0
  %v518 = vadd.f32 0.0, %v517
  %v519 = vpop.f32.mrb[0].mxu0
  %520 = vdwg.mxu0
  %v521 = vmax.f32 %v397, %v515
  %v522 = vmax.f32 %v398, %v518
  %v523 = vld [vmem:[%s2] sm:$0xff]
  %v524 = vld [vmem:[%s2 + $0x8] sm:$0xff]
  %526 = vset.pattern.permute.xlu0 0
  %527 = vperm.xlu0 %526, %v523
  %v528 = vpop.permute.xlu0 %527
  %531 = vset.pattern.permute.xlu0 0
  %532 = vperm.xlu0 %531, %v524
  %v533 = vpop.permute.xlu0 %532
  %v535 = vadd.f32 %v521, %v528
  %v536 = vadd.f32 %v522, %v533
  %v537 = vmax.f32 %v535, 0.0
  %v538 = vmax.f32 %v536, 0.0
  %539 = vst [vmem:[%s3] sm:$0xff] %v537
  %540 = vst [vmem:[%s3 + $0x8] sm:$0xff] %v538
  // Predicated region
  $region14: #{lenet5_forward.4} parent=0 // pred_check
    _
  $region15: #{lenet5_forward.4} parent=0 // pred_check_branch
    %542 = sbr.rel (0) target = $region17
  $region16: #{lenet5_forward.4} parent=0 // pred_region
    _
  $region17: #{lenet5_forward.4} parent=0 // pred_fallthru
    _
  // Predicated region
  $region18: #{lenet5_forward.4} parent=0 // pred_check
    _
  $region19: #{lenet5_forward.4} parent=0 // pred_check_branch
    %544 = sbr.rel (0) target = $region21
  $region20: #{lenet5_forward.4} parent=0 // pred_region
    _
  $region21: #{lenet5_forward.4} parent=0 // pred_fallthru
    _

// kernel: lenet5_forward.5
$region0: #{lenet5_forward.5}
  #allocation0 [shape = 'u32[]', space=smem, size = 0x4, offset = 0x4, fixed_abs, tag = 'smem constant byte address 0x4 - core index']
  #allocation1 [shape = 'u32[144,128]{1,0:T(1,128)}', space=vmem, size = 0x12000, scoped, tag = 'internal scratch']
  %s0 = inlined_call_operand.vmem [shape: bf16[16,400], index: 0, kind: input, shape index: {}]
  %s1 = inlined_call_operand.vmem [shape: bf16[400,128], index: 1, kind: input, shape index: {}]
  %s2 = inlined_call_operand.vmem [shape: f32[1,128], index: 2, kind: input, shape index: {}]
  %s3 = inlined_call_operand.vmem [shape: bf16[128,128], index: 3, kind: input, shape index: {}]
  %s4 = inlined_call_operand.vmem [shape: f32[1,128], index: 4, kind: input, shape index: {}]
  %s5 = inlined_call_operand.vmem [shape: bf16[128,128], index: 5, kind: input, shape index: {}]
  %s6 = inlined_call_operand.vmem [shape: f32[1,128], index: 6, kind: input, shape index: {}]
  %s7 = inlined_call_operand.vmem [shape: f32[16,128], index: 7, kind: output, shape index: {}]
  %s8 = sld [smem:[#allocation0]]
  $region38: #{lenet5_forward.5} parent=0
    _
  %s10 = ssub.s32 1, %s8
  %s11 = scalar_select 0, %s10, %s8
  // Predicated region
  $region2: #{lenet5_forward.5} parent=0 // pred_check
    _
  $region3: #{lenet5_forward.5} parent=0 // pred_check_branch
    %13 = sbr.rel (0) target = $region5
  $region4: #{lenet5_forward.5} parent=0 // pred_region
    _
  $region5: #{lenet5_forward.5} parent=0 // pred_fallthru
    _
  // Predicated region
  $region6: #{lenet5_forward.5} parent=0 // pred_check
    _
  $region7: #{lenet5_forward.5} parent=0 // pred_check_branch
    %15 = sbr.rel (0) target = $region9
  $region8: #{lenet5_forward.5} parent=0 // pred_region
    _
  $region9: #{lenet5_forward.5} parent=0 // pred_fallthru
    _
  // Predicated region
  $region10: #{lenet5_forward.5} parent=0 // pred_check
    _
  $region11: #{lenet5_forward.5} parent=0 // pred_check_branch
    %17 = sbr.rel (0) target = $region13
  $region12: #{lenet5_forward.5} parent=0 // pred_region
    _
  $region13: #{lenet5_forward.5} parent=0 // pred_fallthru
    _
  // Predicated region
  $region14: #{lenet5_forward.5} parent=0 // pred_check
    _
  $region15: #{lenet5_forward.5} parent=0 // pred_check_branch
    %19 = sbr.rel (0) target = $region17
  $region16: #{lenet5_forward.5} parent=0 // pred_region
    _
  $region17: #{lenet5_forward.5} parent=0 // pred_fallthru
    _
  // Predicated region
  $region18: #{lenet5_forward.5} parent=0 // pred_check
    _
  $region19: #{lenet5_forward.5} parent=0 // pred_check_branch
    %21 = sbr.rel (0) target = $region21
  $region20: #{lenet5_forward.5} parent=0 // pred_region
    _
  $region21: #{lenet5_forward.5} parent=0 // pred_fallthru
    _
  // Predicated region
  $region22: #{lenet5_forward.5} parent=0 // pred_check
    _
  $region23: #{lenet5_forward.5} parent=0 // pred_check_branch
    %23 = sbr.rel (0) target = $region25
  $region24: #{lenet5_forward.5} parent=0 // pred_region
    _
  $region25: #{lenet5_forward.5} parent=0 // pred_fallthru
    _
  // Predicated region
  $region26: #{lenet5_forward.5} parent=0 // pred_check
    _
  $region27: #{lenet5_forward.5} parent=0 // pred_check_branch
    %25 = sbr.rel (0) target = $region29
  $region28: #{lenet5_forward.5} parent=0 // pred_region
    _
  $region29: #{lenet5_forward.5} parent=0 // pred_fallthru
    _
  %v27 = vld [vmem:[%s0] sm:$0xff]
  %v28 = vld [vmem:[%s0 + $0x8] sm:$0xff]
  %v29 = vld [vmem:[%s0 + $0x10] sm:$0xff]
  %v30 = vld [vmem:[%s0 + $0x18] sm:$0xff]
  %v31 = vld [vmem:[%s1] sm:$0xf]
  %v32 = vld [vmem:[%s1 + $0x4] sm:$0xf]
  %v33 = vld [vmem:[%s1 + $0x8] sm:$0xf]
  %v34 = vld [vmem:[%s1 + $0xc] sm:$0xf]
  %v35 = vld [vmem:[%s1 + $0x10] sm:$0xf]
  %v36 = vld [vmem:[%s1 + $0x14] sm:$0xf]
  %v37 = vld [vmem:[%s1 + $0x18] sm:$0xf]
  %v38 = vld [vmem:[%s1 + $0x1c] sm:$0xf]
  %v39 = vld [vmem:[%s1 + $0x20] sm:$0xf]
  %v40 = vld [vmem:[%s1 + $0x24] sm:$0xf]
  %v41 = vld [vmem:[%s1 + $0x28] sm:$0xf]
  %v42 = vld [vmem:[%s1 + $0x2c] sm:$0xf]
  %v43 = vld [vmem:[%s1 + $0x30] sm:$0xf]
  %v44 = vld [vmem:[%s1 + $0x34] sm:$0xf]
  %v45 = vld [vmem:[%s1 + $0x38] sm:$0xf]
  %v46 = vld [vmem:[%s1 + $0x3c] sm:$0xf]
  %v47 = vld [vmem:[%s1 + $0x40] sm:$0xf]
  %v48 = vld [vmem:[%s1 + $0x44] sm:$0xf]
  %v49 = vld [vmem:[%s1 + $0x48] sm:$0xf]
  %v50 = vld [vmem:[%s1 + $0x4c] sm:$0xf]
  %v51 = vld [vmem:[%s1 + $0x50] sm:$0xf]
  %v52 = vld [vmem:[%s1 + $0x54] sm:$0xf]
  %v53 = vld [vmem:[%s1 + $0x58] sm:$0xf]
  %v54 = vld [vmem:[%s1 + $0x5c] sm:$0xf]
  %v55 = vld [vmem:[%s1 + $0x60] sm:$0xf]
  %v56 = vld [vmem:[%s1 + $0x64] sm:$0xf]
  %v57 = vld [vmem:[%s1 + $0x68] sm:$0xf]
  %v58 = vld [vmem:[%s1 + $0x6c] sm:$0xf]
  %v59 = vld [vmem:[%s1 + $0x70] sm:$0xf]
  %v60 = vld [vmem:[%s1 + $0x74] sm:$0xf]
  %v61 = vld [vmem:[%s1 + $0x78] sm:$0xf]
  %v62 = vld [vmem:[%s1 + $0x7c] sm:$0xf]
  %v63 = vld [vmem:[%s1 + $0x80] sm:$0xf]
  %v64 = vld [vmem:[%s1 + $0x84] sm:$0xf]
  %v65 = vld [vmem:[%s1 + $0x88] sm:$0xf]
  %v66 = vld [vmem:[%s1 + $0x8c] sm:$0xf]
  %v67 = vld [vmem:[%s1 + $0x90] sm:$0xf]
  %v68 = vld [vmem:[%s1 + $0x94] sm:$0xf]
  %v69 = vld [vmem:[%s1 + $0x98] sm:$0xf]
  %v70 = vld [vmem:[%s1 + $0x9c] sm:$0xf]
  %v71 = vld [vmem:[%s1 + $0xa0] sm:$0xf]
  %v72 = vld [vmem:[%s1 + $0xa4] sm:$0xf]
  %v73 = vld [vmem:[%s1 + $0xa8] sm:$0xf]
  %v74 = vld [vmem:[%s1 + $0xac] sm:$0xf]
  %v75 = vld [vmem:[%s1 + $0xb0] sm:$0xf]
  %v76 = vld [vmem:[%s1 + $0xb4] sm:$0xf]
  %v77 = vld [vmem:[%s1 + $0xb8] sm:$0xf]
  %v78 = vld [vmem:[%s1 + $0xbc] sm:$0xf]
  %v79 = vld [vmem:[%s1 + $0xc0] sm:$0xf]
  %v80 = vld [vmem:[%s1 + $0xc4] sm:$0xf]
  %v81 = vld [vmem:[%s2] sm:$0x1]
  %v83 = vlaneseq
  %v84 = vshrl.u32 %v83, 7
  %v85 = vsub.s32 0, %v84
  %v86 = vrot.slane %v81, %v85
  %v92 = vunpack.c.l.b16 %v27
  %v93 = vunpack.c.h.b16 %v27
  %v94 = vunpack.c.l.b16 %v28
  %v95 = vunpack.c.h.b16 %v28
  %v96 = vunpack.c.l.b16 %v29
  %v97 = vunpack.c.h.b16 %v29
  %v98 = vunpack.c.l.b16 %v30
  %v99 = vunpack.c.h.b16 %v30
  %v100 = vpack.c.b16 %v96, %v92
  %v101 = vpack.c.b16 %v97, %v93
  %v102 = vpack.c.b16 %v98, %v94
  %v103 = vpack.c.b16 %v99, %v95
  %v157 = vunpack.c.l.b16 %v31
  %v158 = vunpack.c.l.b16 %v32
  %v159 = vunpack.c.l.b16 %v33
  %v160 = vunpack.c.l.b16 %v34
  %v161 = vunpack.c.l.b16 %v35
  %v162 = vunpack.c.l.b16 %v36
  %v163 = vunpack.c.l.b16 %v37
  %v164 = vunpack.c.l.b16 %v38
  %v165 = vunpack.c.l.b16 %v39
  %v166 = vunpack.c.l.b16 %v40
  %v167 = vunpack.c.l.b16 %v41
  %v168 = vunpack.c.l.b16 %v42
  %v169 = vunpack.c.l.b16 %v43
  %v170 = vunpack.c.l.b16 %v44
  %v171 = vunpack.c.l.b16 %v45
  %v172 = vunpack.c.l.b16 %v46
  %v173 = vunpack.c.l.b16 %v47
  %v174 = vunpack.c.l.b16 %v48
  %v175 = vunpack.c.l.b16 %v49
  %v176 = vunpack.c.l.b16 %v50
  %v177 = vunpack.c.l.b16 %v51
  %v178 = vunpack.c.l.b16 %v52
  %v179 = vunpack.c.l.b16 %v53
  %v180 = vunpack.c.l.b16 %v54
  %v181 = vunpack.c.l.b16 %v55
  %v182 = vunpack.c.l.b16 %v56
  %v183 = vunpack.c.l.b16 %v57
  %v184 = vunpack.c.l.b16 %v58
  %v185 = vunpack.c.l.b16 %v59
  %v186 = vunpack.c.l.b16 %v60
  %v187 = vunpack.c.l.b16 %v61
  %v188 = vunpack.c.l.b16 %v62
  %v189 = vunpack.c.l.b16 %v63
  %v190 = vunpack.c.l.b16 %v64
  %v191 = vunpack.c.l.b16 %v65
  %v192 = vunpack.c.l.b16 %v66
  %v193 = vunpack.c.l.b16 %v67
  %v194 = vunpack.c.l.b16 %v68
  %v195 = vunpack.c.l.b16 %v69
  %v196 = vunpack.c.l.b16 %v70
  %v197 = vunpack.c.l.b16 %v71
  %v198 = vunpack.c.l.b16 %v72
  %v199 = vunpack.c.l.b16 %v73
  %v200 = vunpack.c.l.b16 %v74
  %v201 = vunpack.c.l.b16 %v75
  %v202 = vunpack.c.l.b16 %v76
  %v203 = vunpack.c.l.b16 %v77
  %v204 = vunpack.c.l.b16 %v78
  %v205 = vunpack.c.l.b16 %v79
  %v206 = vunpack.c.l.b16 %v80
  %v207 = vpack.c.b16 %v158, %v157
  %v208 = vpack.c.b16 %v160, %v159
  %v209 = vpack.c.b16 %v162, %v161
  %v210 = vpack.c.b16 %v164, %v163
  %v211 = vpack.c.b16 %v166, %v165
  %v212 = vpack.c.b16 %v168, %v167
  %v213 = vpack.c.b16 %v170, %v169
  %v214 = vpack.c.b16 %v172, %v171
  %v215 = vpack.c.b16 %v174, %v173
  %v216 = vpack.c.b16 %v176, %v175
  %v217 = vpack.c.b16 %v178, %v177
  %v218 = vpack.c.b16 %v180, %v179
  %v219 = vpack.c.b16 %v182, %v181
  %v220 = vpack.c.b16 %v184, %v183
  %v221 = vpack.c.b16 %v186, %v185
  %v222 = vpack.c.b16 %v188, %v187
  %v223 = vpack.c.b16 %v190, %v189
  %v224 = vpack.c.b16 %v192, %v191
  %v225 = vpack.c.b16 %v194, %v193
  %v226 = vpack.c.b16 %v196, %v195
  %v227 = vpack.c.b16 %v198, %v197
  %v228 = vpack.c.b16 %v200, %v199
  %v229 = vpack.c.b16 %v202, %v201
  %v230 = vpack.c.b16 %v204, %v203
  %v231 = vpack.c.b16 %v206, %v205
  %vm257 = vcmask 130048
  %v259 = vsel %vm257, %v103, 0
  %261 = vmatprep.subr.bf16.mxu0 0
  %262 = vmatpush1.bf16.msra.mxu0 %v207
  %263 = vmatprep.subr.bf16.mxu0 0
  %264 = vmatpush1.bf16.msra.mxu0 %v208
  %265 = vmatprep.subr.bf16.mxu0 0
  %266 = vmatpush1.bf16.msra.mxu0 %v209
  %267 = vmatprep.subr.bf16.mxu0 0
  %268 = vmatpush1.bf16.msra.mxu0 %v210
  %269 = vmatprep.subr.bf16.mxu0 0
  %270 = vmatpush1.bf16.msra.mxu0 %v211
  %271 = vmatprep.subr.bf16.mxu0 0
  %272 = vmatpush1.bf16.msra.mxu0 %v212
  %273 = vmatprep.subr.bf16.mxu0 0
  %274 = vmatpush1.bf16.msra.mxu0 %v213
  %275 = vmatprep.subr.bf16.mxu0 0
  %276 = vmatpush1.bf16.msra.mxu0 %v214
  %277 = vmatprep.subr.bf16.mxu0 0
  %278 = vmatpush1.bf16.msra.mxu0 %v215
  %279 = vmatprep.subr.bf16.mxu0 0
  %280 = vmatpush1.bf16.msra.mxu0 %v216
  %281 = vmatprep.subr.bf16.mxu0 0
  %282 = vmatpush1.bf16.msra.mxu0 %v217
  %283 = vmatprep.subr.bf16.mxu0 0
  %284 = vmatpush1.bf16.msra.mxu0 %v218
  %285 = vmatprep.subr.bf16.mxu0 0
  %286 = vmatpush1.bf16.msra.mxu0 %v219
  %287 = vmatprep.subr.bf16.mxu0 0
  %288 = vmatpush1.bf16.msra.mxu0 %v220
  %289 = vmatprep.subr.bf16.mxu0 0
  %290 = vmatpush1.bf16.msra.mxu0 %v221
  %291 = vmatprep.subr.bf16.mxu0 0
  %292 = vmatpush1.bf16.msra.mxu0 %v222
  %293 = vmatprep.mubr.bf16.mxu0 %v101
  %294 = vmatmul.mubr.bf16.gmra.mrb[0].mxu0 %v100
  %v295 = vpop.f32.mrb[0].mxu0
  %v296 = vadd.f32 %v86, %v295
  %v297 = vpop.f32.mrb[0].mxu0
  %v298 = vpop.f32.mrb[0].mxu0
  %v299 = vadd.f32 %v86, %v298
  %v300 = vpop.f32.mrb[0].mxu0
  %301 = vdwg.mxu0
  %302 = vmatprep.subr.bf16.mxu0 0
  %303 = vmatpush1.bf16.msra.mxu0 %v223
  %304 = vmatprep.subr.bf16.mxu0 0
  %305 = vmatpush1.bf16.msra.mxu0 %v224
  %306 = vmatprep.subr.bf16.mxu0 0
  %307 = vmatpush1.bf16.msra.mxu0 %v225
  %308 = vmatprep.subr.bf16.mxu0 0
  %309 = vmatpush1.bf16.msra.mxu0 %v226
  %310 = vmatprep.subr.bf16.mxu0 0
  %311 = vmatpush1.bf16.msra.mxu0 %v227
  %312 = vmatprep.subr.bf16.mxu0 0
  %313 = vmatpush1.bf16.msra.mxu0 %v228
  %314 = vmatprep.subr.bf16.mxu0 0
  %315 = vmatpush1.bf16.msra.mxu0 %v229
  %316 = vmatprep.subr.bf16.mxu0 0
  %317 = vmatpush1.bf16.msra.mxu0 %v230
  %318 = vmatprep.subr.bf16.mxu0 0
  %319 = vmatpush1.bf16.msra.mxu0 %v231
  %320 = vmatprep.subr.bf16.mxu0 0
  %321 = vmatpush1.bf16.msra.mxu0 0
  %322 = vmatprep.subr.bf16.mxu0 0
  %323 = vmatpush1.bf16.msra.mxu0 0
  %324 = vmatprep.subr.bf16.mxu0 0
  %325 = vmatpush1.bf16.msra.mxu0 0
  %326 = vmatprep.subr.bf16.mxu0 0
  %327 = vmatpush1.bf16.msra.mxu0 0
  %328 = vmatprep.subr.bf16.mxu0 0
  %329 = vmatpush1.bf16.msra.mxu0 0
  %330 = vmatprep.subr.bf16.mxu0 0
  %331 = vmatpush1.bf16.msra.mxu0 0
  %332 = vmatprep.subr.bf16.mxu0 0
  %333 = vmatpush1.bf16.msra.mxu0 0
  %334 = vmatprep.mubr.bf16.mxu0 %v259
  %335 = vmatmul.mubr.bf16.gmra.mrb[0].mxu0 %v102
  %v336 = vpop.f32.mrb[0].mxu0
  %v337 = vadd.f32 %v296, %v336
  %v338 = vpop.f32.mrb[0].mxu0
  %v339 = vpop.f32.mrb[0].mxu0
  %v340 = vadd.f32 %v299, %v339
  %v341 = vpop.f32.mrb[0].mxu0
  %342 = vdwg.mxu0
  %v343 = vmax.f32 %v337, 0.0
  %v344 = vmax.f32 %v340, 0.0
  %v345 = vpack.c.bf16 %v344, %v343
  %v346 = vld [vmem:[%s3] sm:$0xf]
  %v347 = vld [vmem:[%s3 + $0x4] sm:$0xf]
  %v348 = vld [vmem:[%s3 + $0x8] sm:$0xf]
  %v349 = vld [vmem:[%s3 + $0xc] sm:$0xf]
  %v350 = vld [vmem:[%s3 + $0x10] sm:$0xf]
  %v351 = vld [vmem:[%s3 + $0x14] sm:$0xf]
  %v352 = vld [vmem:[%s3 + $0x18] sm:$0xf]
  %v353 = vld [vmem:[%s3 + $0x1c] sm:$0xf]
  %v354 = vld [vmem:[%s3 + $0x20] sm:$0xf]
  %v355 = vld [vmem:[%s3 + $0x24] sm:$0xf]
  %v356 = vld [vmem:[%s3 + $0x28] sm:$0xf]
  %v357 = vld [vmem:[%s3 + $0x2c] sm:$0xf]
  %v358 = vld [vmem:[%s3 + $0x30] sm:$0xf]
  %v359 = vld [vmem:[%s3 + $0x34] sm:$0xf]
  %v360 = vld [vmem:[%s3 + $0x38] sm:$0xf]
  %v361 = vld [vmem:[%s3 + $0x3c] sm:$0xf]
  %v362 = vld [vmem:[%s4] sm:$0x1]
  %v364 = vlaneseq
  %v365 = vshrl.u32 %v364, 7
  %v366 = vsub.s32 0, %v365
  %v367 = vrot.slane %v362, %v366
  %v385 = vunpack.c.l.b16 %v346
  %v386 = vunpack.c.l.b16 %v347
  %v387 = vunpack.c.l.b16 %v348
  %v388 = vunpack.c.l.b16 %v349
  %v389 = vunpack.c.l.b16 %v350
  %v390 = vunpack.c.l.b16 %v351
  %v391 = vunpack.c.l.b16 %v352
  %v392 = vunpack.c.l.b16 %v353
  %v393 = vunpack.c.l.b16 %v354
  %v394 = vunpack.c.l.b16 %v355
  %v395 = vunpack.c.l.b16 %v356
  %v396 = vunpack.c.l.b16 %v357
  %v397 = vunpack.c.l.b16 %v358
  %v398 = vunpack.c.l.b16 %v359
  %v399 = vunpack.c.l.b16 %v360
  %v400 = vunpack.c.l.b16 %v361
  %v401 = vpack.c.b16 %v386, %v385
  %v402 = vpack.c.b16 %v388, %v387
  %v403 = vpack.c.b16 %v390, %v389
  %v404 = vpack.c.b16 %v392, %v391
  %v405 = vpack.c.b16 %v394, %v393
  %v406 = vpack.c.b16 %v396, %v395
  %v407 = vpack.c.b16 %v398, %v397
  %v408 = vpack.c.b16 %v400, %v399
  %417 = vmatprep.subr.bf16.mxu0 0
  %418 = vmatpush1.bf16.msra.mxu0 %v401
  %419 = vmatprep.subr.bf16.mxu0 0
  %420 = vmatpush1.bf16.msra.mxu0 %v402
  %421 = vmatprep.subr.bf16.mxu0 0
  %422 = vmatpush1.bf16.msra.mxu0 %v403
  %423 = vmatprep.subr.bf16.mxu0 0
  %424 = vmatpush1.bf16.msra.mxu0 %v404
  %425 = vmatprep.subr.bf16.mxu0 0
  %426 = vmatpush1.bf16.msra.mxu0 %v405
  %427 = vmatprep.subr.bf16.mxu0 0
  %428 = vmatpush1.bf16.msra.mxu0 %v406
  %429 = vmatprep.subr.bf16.mxu0 0
  %430 = vmatpush1.bf16.msra.mxu0 %v407
  %431 = vmatprep.subr.bf16.mxu0 0
  %432 = vmatpush1.bf16.msra.mxu0 %v408
  %433 = vmatprep.subr.bf16.mxu0 0
  %434 = vmatpush1.bf16.msra.mxu0 0
  %435 = vmatprep.subr.bf16.mxu0 0
  %436 = vmatpush1.bf16.msra.mxu0 0
  %437 = vmatprep.subr.bf16.mxu0 0
  %438 = vmatpush1.bf16.msra.mxu0 0
  %439 = vmatprep.subr.bf16.mxu0 0
  %440 = vmatpush1.bf16.msra.mxu0 0
  %441 = vmatprep.subr.bf16.mxu0 0
  %442 = vmatpush1.bf16.msra.mxu0 0
  %443 = vmatprep.subr.bf16.mxu0 0
  %444 = vmatpush1.bf16.msra.mxu0 0
  %445 = vmatprep.subr.bf16.mxu0 0
  %446 = vmatpush1.bf16.msra.mxu0 0
  %447 = vmatprep.subr.bf16.mxu0 0
  %448 = vmatpush1.bf16.msra.mxu0 0
  %449 = vmatprep.mubr.bf16.mxu0 0
  %450 = vmatmul.mubr.bf16.gmra.mrb[0].mxu0 %v345
  %v451 = vpop.f32.mrb[0].mxu0
  %v452 = vadd.f32 %v367, %v451
  %v453 = vpop.f32.mrb[0].mxu0
  %v454 = vpop.f32.mrb[0].mxu0
  %v455 = vadd.f32 %v367, %v454
  %v456 = vpop.f32.mrb[0].mxu0
  %457 = vdwg.mxu0
  %v458 = vmax.f32 %v452, 0.0
  %v459 = vmax.f32 %v455, 0.0
  %v460 = vpack.c.bf16 %v459, %v458
  %v461 = vld [vmem:[%s5] sm:$0xf]
  %v462 = vld [vmem:[%s5 + $0x4] sm:$0xf]
  %v463 = vld [vmem:[%s5 + $0x8] sm:$0xf]
  %v464 = vld [vmem:[%s5 + $0xc] sm:$0xf]
  %v465 = vld [vmem:[%s5 + $0x10] sm:$0xf]
  %v466 = vld [vmem:[%s5 + $0x14] sm:$0xf]
  %v467 = vld [vmem:[%s5 + $0x18] sm:$0xf]
  %v468 = vld [vmem:[%s5 + $0x1c] sm:$0xf]
  %v469 = vld [vmem:[%s5 + $0x20] sm:$0xf]
  %v470 = vld [vmem:[%s5 + $0x24] sm:$0xf]
  %v471 = vld [vmem:[%s5 + $0x28] sm:$0xf]
  %v472 = vld [vmem:[%s5 + $0x2c] sm:$0xf]
  %v473 = vld [vmem:[%s5 + $0x30] sm:$0xf]
  %v474 = vld [vmem:[%s5 + $0x34] sm:$0xf]
  %v475 = vld [vmem:[%s5 + $0x38] sm:$0xf]
  %v476 = vld [vmem:[%s5 + $0x3c] sm:$0xf]
  %v477 = vld [vmem:[%s6] sm:$0x1]
  %v479 = vlaneseq
  %v480 = vshrl.u32 %v479, 7
  %v481 = vsub.s32 0, %v480
  %v482 = vrot.slane %v477, %v481
  %v500 = vunpack.c.l.b16 %v461
  %v501 = vunpack.c.l.b16 %v462
  %v502 = vunpack.c.l.b16 %v463
  %v503 = vunpack.c.l.b16 %v464
  %v504 = vunpack.c.l.b16 %v465
  %v505 = vunpack.c.l.b16 %v466
  %v506 = vunpack.c.l.b16 %v467
  %v507 = vunpack.c.l.b16 %v468
  %v508 = vunpack.c.l.b16 %v469
  %v509 = vunpack.c.l.b16 %v470
  %v510 = vunpack.c.l.b16 %v471
  %v511 = vunpack.c.l.b16 %v472
  %v512 = vunpack.c.l.b16 %v473
  %v513 = vunpack.c.l.b16 %v474
  %v514 = vunpack.c.l.b16 %v475
  %v515 = vunpack.c.l.b16 %v476
  %v516 = vpack.c.b16 %v501, %v500
  %v517 = vpack.c.b16 %v503, %v502
  %v518 = vpack.c.b16 %v505, %v504
  %v519 = vpack.c.b16 %v507, %v506
  %v520 = vpack.c.b16 %v509, %v508
  %v521 = vpack.c.b16 %v511, %v510
  %v522 = vpack.c.b16 %v513, %v512
  %v523 = vpack.c.b16 %v515, %v514
  %532 = vmatprep.subr.bf16.mxu0 0
  %533 = vmatpush1.bf16.msra.mxu0 %v516
  %534 = vmatprep.subr.bf16.mxu0 0
  %535 = vmatpush1.bf16.msra.mxu0 %v517
  %536 = vmatprep.subr.bf16.mxu0 0
  %537 = vmatpush1.bf16.msra.mxu0 %v518
  %538 = vmatprep.subr.bf16.mxu0 0
  %539 = vmatpush1.bf16.msra.mxu0 %v519
  %540 = vmatprep.subr.bf16.mxu0 0
  %541 = vmatpush1.bf16.msra.mxu0 %v520
  %542 = vmatprep.subr.bf16.mxu0 0
  %543 = vmatpush1.bf16.msra.mxu0 %v521
  %544 = vmatprep.subr.bf16.mxu0 0
  %545 = vmatpush1.bf16.msra.mxu0 %v522
  %546 = vmatprep.subr.bf16.mxu0 0
  %547 = vmatpush1.bf16.msra.mxu0 %v523
  %548 = vmatprep.subr.bf16.mxu0 0
  %549 = vmatpush1.bf16.msra.mxu0 0
  %550 = vmatprep.subr.bf16.mxu0 0
  %551 = vmatpush1.bf16.msra.mxu0 0
  %552 = vmatprep.subr.bf16.mxu0 0
  %553 = vmatpush1.bf16.msra.mxu0 0
  %554 = vmatprep.subr.bf16.mxu0 0
  %555 = vmatpush1.bf16.msra.mxu0 0
  %556 = vmatprep.subr.bf16.mxu0 0
  %557 = vmatpush1.bf16.msra.mxu0 0
  %558 = vmatprep.subr.bf16.mxu0 0
  %559 = vmatpush1.bf16.msra.mxu0 0
  %560 = vmatprep.subr.bf16.mxu0 0
  %561 = vmatpush1.bf16.msra.mxu0 0
  %562 = vmatprep.subr.bf16.mxu0 0
  %563 = vmatpush1.bf16.msra.mxu0 0
  %564 = vmatprep.mubr.bf16.mxu0 0
  %565 = vmatmul.mubr.bf16.gmra.mrb[0].mxu0 %v460
  %v566 = vpop.f32.mrb[0].mxu0
  %v567 = vadd.f32 %v482, %v566
  %v568 = vpop.f32.mrb[0].mxu0
  %v569 = vpop.f32.mrb[0].mxu0
  %v570 = vadd.f32 %v482, %v569
  %v571 = vpop.f32.mrb[0].mxu0
  %572 = vdwg.mxu0
  %573 = vst [vmem:[%s7] sm:$0xff] %v567
  %574 = vst [vmem:[%s7 + $0x8] sm:$0xff] %v570
  // Predicated region
  $region30: #{lenet5_forward.5} parent=0 // pred_check
    _
  $region31: #{lenet5_forward.5} parent=0 // pred_check_branch
    %576 = sbr.rel (0) target = $region33
  $region32: #{lenet5_forward.5} parent=0 // pred_region
    _
  $region33: #{lenet5_forward.5} parent=0 // pred_fallthru
    _
  // Predicated region
  $region34: #{lenet5_forward.5} parent=0 // pred_check
    _
  $region35: #{lenet5_forward.5} parent=0 // pred_check_branch
    %578 = sbr.rel (0) target = $region37
  $region36: #{lenet5_forward.5} parent=0 // pred_region
    _
  $region37: #{lenet5_forward.5} parent=0 // pred_fallthru
    _

</llo_original>
